<compile_context>
chip_gen: v6e
topology: v6e:2x2x1
jax: 0.10.0
libtpu: 0.0.40
codegen_flags: <defaults>
</compile_context>

<pallas_src>
import functools
import math

import jax
import jax.numpy as jnp
from jax import lax
from jax.experimental import pallas as pl
from jax.experimental.pallas import tpu as pltpu

_EPS = 1e-6
_NEG_INF = -1e9


# ----------------------------------------------------------------------------
# Fused encoder-layer kernel (one grid step == one batch element).
# ----------------------------------------------------------------------------
def _encoder_layer_kernel(x_ref, mbias_ref,
                          ln1g_ref, ln1b_ref,
                          wq_ref, wk_ref, wv_ref,
                          bq_ref, bk_ref, bv_ref,
                          wo_ref, bo_ref,
                          ln2g_ref, ln2b_ref,
                          w1_ref, b1_ref,
                          w2_ref, b2_ref,
                          out_ref,
                          *, num_heads):
    x = x_ref[0]                                   # (S, D) f32
    S, D = x.shape

    def layer_norm(v, g, b):
        # torch: a2 * (v - mean) / (std + eps) + b2, std unbiased (N-1).
        mean = jnp.mean(v, axis=-1, keepdims=True)
        c = v - mean
        var = jnp.sum(c * c, axis=-1, keepdims=True) * (1.0 / (D - 1))
        std = jnp.sqrt(var)
        return g * c / (std + _EPS) + b

    # ---- sublayer 0: pre-norm + multi-headed self-attention + residual ----
    ln1 = layer_norm(x, ln1g_ref[...], ln1b_ref[...])
    ln1_bf = ln1.astype(jnp.bfloat16)

    # Fused per-head projections: one lane-dense (S, h*D) bf16 matmul each,
    # f32 accumulation.  1/sqrt(D) is already folded into wq/bq.
    qh = jnp.dot(ln1_bf, wq_ref[...],
                 preferred_element_type=jnp.float32) + bq_ref[...]
    kh = jnp.dot(ln1_bf, wk_ref[...],
                 preferred_element_type=jnp.float32) + bk_ref[...]
    vh = jnp.dot(ln1_bf, wv_ref[...],
                 preferred_element_type=jnp.float32) + bv_ref[...]

    mbias = mbias_ref[0]                           # (S, S) f32 additive bias

    # Per-head scores / softmax / PV and the fused output projection.
    # Equivalent to concat(heads, -1) @ Wo^T; computed as a sum of per-head
    # partial matmuls (avoids an in-kernel lane concatenation).
    # TODO(synk): at realistic per-head dims also run QK^T / PV in bf16.
    attn_acc = jnp.zeros((S, D), jnp.float32)
    for hi in range(num_heads):
        qs = qh[:, hi * D:(hi + 1) * D]            # (S, D) f32
        ks = kh[:, hi * D:(hi + 1) * D]
        vs = vh[:, hi * D:(hi + 1) * D]
        scores = lax.dot_general(qs, ks, (((1,), (1,)), ((), ())),
                                 preferred_element_type=jnp.float32)
        scores = scores + mbias                    # masked_fill as an add
        m = jnp.max(scores, axis=-1, keepdims=True)
        p = jnp.exp(scores - m)
        denom = jnp.sum(p, axis=-1, keepdims=True)
        p = p * pl.reciprocal(denom, approx=True)  # EUP slot
        pv = jnp.dot(p, vs, preferred_element_type=jnp.float32)   # (S, D)
        attn_acc = attn_acc + jnp.dot(
            pv.astype(jnp.bfloat16), wo_ref[hi * D:(hi + 1) * D, :],
            preferred_element_type=jnp.float32)

    y = x + attn_acc + bo_ref[...]                 # residual (dropout=identity)

    # ---- sublayer 1: pre-norm + positionwise feed-forward + residual ----
    ln2 = layer_norm(y, ln2g_ref[...], ln2b_ref[...])
    hmid = jnp.dot(ln2.astype(jnp.bfloat16), w1_ref[...],
                   preferred_element_type=jnp.float32) + b1_ref[...]
    hmid = jnp.maximum(hmid, 0.0)                  # ReLU in f32
    ffn = jnp.dot(hmid.astype(jnp.bfloat16), w2_ref[...],
                  preferred_element_type=jnp.float32) + b2_ref[...]

    out_ref[0] = y + ffn


# ----------------------------------------------------------------------------
# One-time parameter packing (hoisted out of the forward path).
# ----------------------------------------------------------------------------
def prepare_params(params):
    H, D, _ = params["wq"].shape
    scale = 1.0 / math.sqrt(D)

    def pack_heads(w):        # [H, out, in] -> [in, H*out]  (concat of W_h^T)
        return jnp.transpose(w, (2, 0, 1)).reshape(D, H * D)

    return {
        "ln1_g": params["ln1_g"].reshape(1, D).astype(jnp.float32),
        "ln1_b": params["ln1_b"].reshape(1, D).astype(jnp.float32),
        "ln2_g": params["ln2_g"].reshape(1, D).astype(jnp.float32),
        "ln2_b": params["ln2_b"].reshape(1, D).astype(jnp.float32),
        # Fold 1/sqrt(d_model) into the query projection.
        "wq": (pack_heads(params["wq"]) * scale).astype(jnp.bfloat16),
        "wk": pack_heads(params["wk"]).astype(jnp.bfloat16),
        "wv": pack_heads(params["wv"]).astype(jnp.bfloat16),
        "bq": (params["bq"].reshape(1, H * D) * scale).astype(jnp.float32),
        "bk": params["bk"].reshape(1, H * D).astype(jnp.float32),
        "bv": params["bv"].reshape(1, H * D).astype(jnp.float32),
        "wo": params["wf"].T.astype(jnp.bfloat16),        # [H*D, D]
        "bo": params["bf"].reshape(1, D).astype(jnp.float32),
        "w1": params["w1"].T.astype(jnp.bfloat16),        # [D, d_ff]
        "b1": params["b1"].reshape(1, -1).astype(jnp.float32),
        "w2": params["w2"].T.astype(jnp.bfloat16),        # [d_ff, D]
        "b2": params["b2"].reshape(1, D).astype(jnp.float32),
    }


# ----------------------------------------------------------------------------
# Forward wrapper.
# ----------------------------------------------------------------------------
def encoder_layer_forward(x, mask, prep, num_heads):
    B, S, D = x.shape

    # Additive attention-mask bias: 0 where visible, -1e9 where mask == 0.
    mask_bias = jnp.where(mask == 0, _NEG_INF, 0.0).astype(jnp.float32)

    x_spec = pl.BlockSpec((1, S, D), lambda b: (b, 0, 0))
    m_spec = pl.BlockSpec((1, S, S), lambda b: (b, 0, 0))
    out_spec = pl.BlockSpec((1, S, D), lambda b: (b, 0, 0))

    def rep2d(arr):   # whole (small) 2-D parameter; same block every grid step
        return pl.BlockSpec(arr.shape, lambda b: (0, 0))

    operands = (x.astype(jnp.float32), mask_bias,
                prep["ln1_g"], prep["ln1_b"],
                prep["wq"], prep["wk"], prep["wv"],
                prep["bq"], prep["bk"], prep["bv"],
                prep["wo"], prep["bo"],
                prep["ln2_g"], prep["ln2_b"],
                prep["w1"], prep["b1"],
                prep["w2"], prep["b2"])

    in_specs = [x_spec, m_spec] + [rep2d(a) for a in operands[2:]]

    return pl.pallas_call(
        functools.partial(_encoder_layer_kernel, num_heads=num_heads),
        out_shape=jax.ShapeDtypeStruct((B, S, D), jnp.float32),
        grid_spec=pltpu.PrefetchScalarGridSpec(
            num_scalar_prefetch=0,
            grid=(B,),
            in_specs=in_specs,
            out_specs=out_spec,
        ),
        compiler_params=pltpu.CompilerParams(
            dimension_semantics=("parallel",),
            vmem_limit_bytes=32 * 1024 * 1024,
        ),
    )(*operands)


# ----------------------------------------------------------------------------
# Pure-JAX f32 reference (mirrors the PyTorch module).
# ----------------------------------------------------------------------------
def _reference(x, mask, params):
    D = x.shape[-1]
    H = params["wq"].shape[0]

    def ln(v, g, b):
        mean = v.mean(-1, keepdims=True)
        std = jnp.std(v, axis=-1, keepdims=True, ddof=1)
        return g * (v - mean) / (std + _EPS) + b

    def mha(q, k, v):
        outs = []
        for i in range(H):
            qh = q @ params["wq"][i].T + params["bq"][i]
            kh = k @ params["wk"][i].T + params["bk"][i]
            vh = v @ params["wv"][i].T + params["bv"][i]
            s = jnp.einsum("bsd,btd->bst", qh, kh) / math.sqrt(D)
            s = jnp.where(mask == 0, _NEG_INF, s)
            p = jax.nn.softmax(s, axis=2)
            outs.append(jnp.einsum("bst,btd->bsd", p, vh))
        cat = jnp.concatenate(outs, axis=2)
        return cat @ params["wf"].T + params["bf"]

    def ffn(v):
        h1 = jnp.maximum(v @ params["w1"].T + params["b1"], 0.0)
        return h1 @ params["w2"].T + params["b2"]

    xn = ln(x, params["ln1_g"], params["ln1_b"])
    y = x + mha(xn, xn, xn)
    yn = ln(y, params["ln2_g"], params["ln2_b"])
    return y + ffn(yn)


if __name__ == "__main__":
    B, S, D, H, D_FF = 2, 8, 32, 4, 64   # h*D = 128 -> lane-dense projections

    key0 = jax.random.PRNGKey(0)
    ks = jax.random.split(key0, 20)

    s_d = 1.0 / math.sqrt(D)
    s_hd = 1.0 / math.sqrt(H * D)
    s_ff = 1.0 / math.sqrt(D_FF)
    params = {
        # LayerNorm params (slightly perturbed so they affect the output).
        "ln1_g": 1.0 + 0.1 * jax.random.normal(ks[0], (D,), jnp.float32),
        "ln1_b": 0.1 * jax.random.normal(ks[1], (D,), jnp.float32),
        "ln2_g": 1.0 + 0.1 * jax.random.normal(ks[2], (D,), jnp.float32),
        "ln2_b": 0.1 * jax.random.normal(ks[3], (D,), jnp.float32),
        # Per-head Q/K/V linears (nn.Linear layout: W [out, in], b [out]).
        "wq": jax.random.uniform(ks[4], (H, D, D), jnp.float32, -s_d, s_d),
        "bq": jax.random.uniform(ks[5], (H, D), jnp.float32, -s_d, s_d),
        "wk": jax.random.uniform(ks[6], (H, D, D), jnp.float32, -s_d, s_d),
        "bk": jax.random.uniform(ks[7], (H, D), jnp.float32, -s_d, s_d),
        "wv": jax.random.uniform(ks[8], (H, D, D), jnp.float32, -s_d, s_d),
        "bv": jax.random.uniform(ks[9], (H, D), jnp.float32, -s_d, s_d),
        # Final attention linear: h*D -> D.
        "wf": jax.random.uniform(ks[10], (D, H * D), jnp.float32, -s_hd, s_hd),
        "bf": jax.random.uniform(ks[11], (D,), jnp.float32, -s_hd, s_hd),
        # Positionwise feed-forward: D -> d_ff -> D.
        "w1": jax.random.uniform(ks[12], (D_FF, D), jnp.float32, -s_d, s_d),
        "b1": jax.random.uniform(ks[13], (D_FF,), jnp.float32, -s_d, s_d),
        "w2": jax.random.uniform(ks[14], (D, D_FF), jnp.float32, -s_ff, s_ff),
        "b2": jax.random.uniform(ks[15], (D,), jnp.float32, -s_ff, s_ff),
    }

    x = jax.random.normal(ks[16], (B, S, D), jnp.float32)
    # Causal-style mask with zeros to exercise masked_fill.
    mask = jnp.tril(jnp.ones((S, S), jnp.float32))[None].repeat(B, axis=0)

    prep = prepare_params(params)        # one-time weight packing (hoisted)

    fwd = jax.jit(functools.partial(encoder_layer_forward, num_heads=H))
    out = fwd(x, mask, prep)
    out = jax.block_until_ready(out)

    ref = _reference(x, mask, params)
    assert out.shape == (B, S, D)
    max_err = float(jnp.max(jnp.abs(out - ref)))
    # bf16 MXU matmuls (f32 accumulation) => allow a few 1e-2 of tolerance.
    assert jnp.allclose(out, ref, atol=5e-2, rtol=5e-2), (
        f"mismatch vs reference, max|err|={max_err}")

    print("KERNEL_OK")
</pallas_src>

<mosaic_0001>
module attributes {stable_mosaic.version = 11 : i64} {
  func.func @_encoder_layer_kernel(%arg0: i32, %arg1: memref<1x8x32xf32, #tpu.memory_space<vmem>>, %arg2: memref<1x8x8xf32, #tpu.memory_space<vmem>>, %arg3: memref<1x32xf32, #tpu.memory_space<vmem>>, %arg4: memref<1x32xf32, #tpu.memory_space<vmem>>, %arg5: memref<32x128xbf16, #tpu.memory_space<vmem>>, %arg6: memref<32x128xbf16, #tpu.memory_space<vmem>>, %arg7: memref<32x128xbf16, #tpu.memory_space<vmem>>, %arg8: memref<1x128xf32, #tpu.memory_space<vmem>>, %arg9: memref<1x128xf32, #tpu.memory_space<vmem>>, %arg10: memref<1x128xf32, #tpu.memory_space<vmem>>, %arg11: memref<128x32xbf16, #tpu.memory_space<vmem>>, %arg12: memref<1x32xf32, #tpu.memory_space<vmem>>, %arg13: memref<1x32xf32, #tpu.memory_space<vmem>>, %arg14: memref<1x32xf32, #tpu.memory_space<vmem>>, %arg15: memref<32x64xbf16, #tpu.memory_space<vmem>>, %arg16: memref<1x64xf32, #tpu.memory_space<vmem>>, %arg17: memref<64x32xbf16, #tpu.memory_space<vmem>>, %arg18: memref<1x32xf32, #tpu.memory_space<vmem>>, %arg19: memref<1x8x32xf32, #tpu.memory_space<vmem>>) attributes {dimension_semantics = [#tpu.dimension_semantics<parallel>], iteration_bounds = array<i64: 2>, scalar_prefetch = 0 : i64, scratch_operands = 0 : i64, tpu.core_type = #tpu.core_type<tc>, window_params = [{transform_indices = @transform_0, window_bounds = array<i64: 1, 8, 32>}, {transform_indices = @transform_1, window_bounds = array<i64: 1, 8, 8>}, {pipeline_mode = #tpu.pipeline_mode<synchronous>, transform_indices = @transform_2, window_bounds = array<i64: 1, 32>}, {pipeline_mode = #tpu.pipeline_mode<synchronous>, transform_indices = @transform_3, window_bounds = array<i64: 1, 32>}, {pipeline_mode = #tpu.pipeline_mode<synchronous>, transform_indices = @transform_4, window_bounds = array<i64: 32, 128>}, {pipeline_mode = #tpu.pipeline_mode<synchronous>, transform_indices = @transform_5, window_bounds = array<i64: 32, 128>}, {pipeline_mode = #tpu.pipeline_mode<synchronous>, transform_indices = @transform_6, window_bounds = array<i64: 32, 128>}, {pipeline_mode = #tpu.pipeline_mode<synchronous>, transform_indices = @transform_7, window_bounds = array<i64: 1, 128>}, {pipeline_mode = #tpu.pipeline_mode<synchronous>, transform_indices = @transform_8, window_bounds = array<i64: 1, 128>}, {pipeline_mode = #tpu.pipeline_mode<synchronous>, transform_indices = @transform_9, window_bounds = array<i64: 1, 128>}, {pipeline_mode = #tpu.pipeline_mode<synchronous>, transform_indices = @transform_10, window_bounds = array<i64: 128, 32>}, {pipeline_mode = #tpu.pipeline_mode<synchronous>, transform_indices = @transform_11, window_bounds = array<i64: 1, 32>}, {pipeline_mode = #tpu.pipeline_mode<synchronous>, transform_indices = @transform_12, window_bounds = array<i64: 1, 32>}, {pipeline_mode = #tpu.pipeline_mode<synchronous>, transform_indices = @transform_13, window_bounds = array<i64: 1, 32>}, {pipeline_mode = #tpu.pipeline_mode<synchronous>, transform_indices = @transform_14, window_bounds = array<i64: 32, 64>}, {pipeline_mode = #tpu.pipeline_mode<synchronous>, transform_indices = @transform_15, window_bounds = array<i64: 1, 64>}, {pipeline_mode = #tpu.pipeline_mode<synchronous>, transform_indices = @transform_16, window_bounds = array<i64: 64, 32>}, {pipeline_mode = #tpu.pipeline_mode<synchronous>, transform_indices = @transform_17, window_bounds = array<i64: 1, 32>}, {transform_indices = @transform_18, window_bounds = array<i64: 1, 8, 32>}]} {
    %c0 = arith.constant 0 : index
    %c0_0 = arith.constant 0 : index
    %c0_1 = arith.constant 0 : index
    %0 = vector.load %arg1[%c0, %c0_0, %c0_1] : memref<1x8x32xf32, #tpu.memory_space<vmem>>, vector<1x8x32xf32>
    %1 = vector.shape_cast %0 : vector<1x8x32xf32> to vector<8x32xf32>
    %c0_2 = arith.constant 0 : index
    %c0_3 = arith.constant 0 : index
    %2 = vector.load %arg3[%c0_2, %c0_3] : memref<1x32xf32, #tpu.memory_space<vmem>>, vector<1x32xf32>
    %c0_4 = arith.constant 0 : index
    %c0_5 = arith.constant 0 : index
    %3 = vector.load %arg4[%c0_4, %c0_5] : memref<1x32xf32, #tpu.memory_space<vmem>>, vector<1x32xf32>
    %cst = arith.constant dense<0.000000e+00> : vector<8xf32>
    %4 = vector.multi_reduction <add>, %1, %cst [1] : vector<8x32xf32> to vector<8xf32>
    %5 = vector.shape_cast %4 : vector<8xf32> to vector<8x1xf32>
    %cst_6 = arith.constant 3.200000e+01 : f32
    %6 = vector.broadcast %cst_6 : f32 to vector<8x1xf32>
    %7 = arith.divf %5, %6 : vector<8x1xf32>
    %8 = vector.broadcast %7 : vector<8x1xf32> to vector<8x32xf32>
    %9 = arith.subf %1, %8 : vector<8x32xf32>
    %10 = arith.mulf %9, %9 : vector<8x32xf32>
    %cst_7 = arith.constant dense<0.000000e+00> : vector<8xf32>
    %11 = vector.multi_reduction <add>, %10, %cst_7 [1] : vector<8x32xf32> to vector<8xf32>
    %12 = vector.shape_cast %11 : vector<8xf32> to vector<8x1xf32>
    %cst_8 = arith.constant 0.0322580636 : f32
    %13 = vector.broadcast %cst_8 : f32 to vector<8x1xf32>
    %14 = arith.mulf %12, %13 : vector<8x1xf32>
    %15 = math.sqrt %14 : vector<8x1xf32>
    %16 = vector.broadcast %2 : vector<1x32xf32> to vector<8x32xf32>
    %17 = arith.mulf %16, %9 : vector<8x32xf32>
    %cst_9 = arith.constant 9.99999997E-7 : f32
    %18 = vector.broadcast %cst_9 : f32 to vector<8x1xf32>
    %19 = arith.addf %15, %18 : vector<8x1xf32>
    %20 = vector.broadcast %19 : vector<8x1xf32> to vector<8x32xf32>
    %21 = arith.divf %17, %20 : vector<8x32xf32>
    %22 = vector.broadcast %3 : vector<1x32xf32> to vector<8x32xf32>
    %23 = arith.addf %21, %22 : vector<8x32xf32>
    %24 = arith.truncf %23 : vector<8x32xf32> to vector<8x32xbf16>
    %c0_10 = arith.constant 0 : index
    %c0_11 = arith.constant 0 : index
    %25 = vector.load %arg5[%c0_10, %c0_11] : memref<32x128xbf16, #tpu.memory_space<vmem>>, vector<32x128xbf16>
    %cst_12 = arith.constant dense<0.000000e+00> : vector<8x128xf32>
    %26 = tpu.matmul %24, %25, %cst_12 {dimension_numbers = #tpu.dot_dimension_numbers<[1], [0], [0], [1], [0, 0, 1, 1], [], []>} : vector<8x32xbf16>, vector<32x128xbf16>, vector<8x128xf32> -> vector<8x128xf32>
    %c0_13 = arith.constant 0 : index
    %c0_14 = arith.constant 0 : index
    %27 = vector.load %arg8[%c0_13, %c0_14] : memref<1x128xf32, #tpu.memory_space<vmem>>, vector<1x128xf32>
    %28 = vector.broadcast %27 : vector<1x128xf32> to vector<8x128xf32>
    %29 = arith.addf %26, %28 : vector<8x128xf32>
    %c0_15 = arith.constant 0 : index
    %c0_16 = arith.constant 0 : index
    %30 = vector.load %arg6[%c0_15, %c0_16] : memref<32x128xbf16, #tpu.memory_space<vmem>>, vector<32x128xbf16>
    %cst_17 = arith.constant dense<0.000000e+00> : vector<8x128xf32>
    %31 = tpu.matmul %24, %30, %cst_17 {dimension_numbers = #tpu.dot_dimension_numbers<[1], [0], [0], [1], [0, 0, 1, 1], [], []>} : vector<8x32xbf16>, vector<32x128xbf16>, vector<8x128xf32> -> vector<8x128xf32>
    %c0_18 = arith.constant 0 : index
    %c0_19 = arith.constant 0 : index
    %32 = vector.load %arg9[%c0_18, %c0_19] : memref<1x128xf32, #tpu.memory_space<vmem>>, vector<1x128xf32>
    %33 = vector.broadcast %32 : vector<1x128xf32> to vector<8x128xf32>
    %34 = arith.addf %31, %33 : vector<8x128xf32>
    %c0_20 = arith.constant 0 : index
    %c0_21 = arith.constant 0 : index
    %35 = vector.load %arg7[%c0_20, %c0_21] : memref<32x128xbf16, #tpu.memory_space<vmem>>, vector<32x128xbf16>
    %cst_22 = arith.constant dense<0.000000e+00> : vector<8x128xf32>
    %36 = tpu.matmul %24, %35, %cst_22 {dimension_numbers = #tpu.dot_dimension_numbers<[1], [0], [0], [1], [0, 0, 1, 1], [], []>} : vector<8x32xbf16>, vector<32x128xbf16>, vector<8x128xf32> -> vector<8x128xf32>
    %c0_23 = arith.constant 0 : index
    %c0_24 = arith.constant 0 : index
    %37 = vector.load %arg10[%c0_23, %c0_24] : memref<1x128xf32, #tpu.memory_space<vmem>>, vector<1x128xf32>
    %38 = vector.broadcast %37 : vector<1x128xf32> to vector<8x128xf32>
    %39 = arith.addf %36, %38 : vector<8x128xf32>
    %c0_25 = arith.constant 0 : index
    %c0_26 = arith.constant 0 : index
    %c0_27 = arith.constant 0 : index
    %40 = vector.load %arg2[%c0_25, %c0_26, %c0_27] : memref<1x8x8xf32, #tpu.memory_space<vmem>>, vector<1x8x8xf32>
    %41 = vector.shape_cast %40 : vector<1x8x8xf32> to vector<8x8xf32>
    %cst_28 = arith.constant 0.000000e+00 : f32
    %42 = vector.broadcast %cst_28 : f32 to vector<8x32xf32>
    %43 = vector.extract_strided_slice %29 {offsets = [0, 0], sizes = [8, 32], strides = [1, 1]} : vector<8x128xf32> to vector<8x32xf32>
    %44 = vector.extract_strided_slice %34 {offsets = [0, 0], sizes = [8, 32], strides = [1, 1]} : vector<8x128xf32> to vector<8x32xf32>
    %45 = vector.extract_strided_slice %39 {offsets = [0, 0], sizes = [8, 32], strides = [1, 1]} : vector<8x128xf32> to vector<8x32xf32>
    %cst_29 = arith.constant dense<0.000000e+00> : vector<8x8xf32>
    %46 = tpu.matmul %43, %44, %cst_29 {dimension_numbers = #tpu.dot_dimension_numbers<[1], [1], [0], [0], [0, 0, 1, 0], [], []>} : vector<8x32xf32>, vector<8x32xf32>, vector<8x8xf32> -> vector<8x8xf32>
    %47 = arith.addf %46, %41 : vector<8x8xf32>
    %cst_30 = arith.constant dense<0xFF800000> : vector<8xf32>
    %48 = vector.multi_reduction <maximumf>, %47, %cst_30 [1] : vector<8x8xf32> to vector<8xf32>
    %49 = vector.shape_cast %48 : vector<8xf32> to vector<8x1xf32>
    %50 = vector.broadcast %49 : vector<8x1xf32> to vector<8x8xf32>
    %51 = arith.subf %47, %50 : vector<8x8xf32>
    %52 = math.exp %51 : vector<8x8xf32>
    %cst_31 = arith.constant dense<0.000000e+00> : vector<8xf32>
    %53 = vector.multi_reduction <add>, %52, %cst_31 [1] : vector<8x8xf32> to vector<8xf32>
    %54 = vector.shape_cast %53 : vector<8xf32> to vector<8x1xf32>
    %55 = tpu.reciprocal %54 {approx = true} : vector<8x1xf32> -> vector<8x1xf32>
    %56 = vector.broadcast %55 : vector<8x1xf32> to vector<8x8xf32>
    %57 = arith.mulf %52, %56 : vector<8x8xf32>
    %cst_32 = arith.constant dense<0.000000e+00> : vector<8x32xf32>
    %58 = tpu.matmul %57, %45, %cst_32 {dimension_numbers = #tpu.dot_dimension_numbers<[1], [0], [0], [1], [0, 0, 1, 1], [], []>} : vector<8x8xf32>, vector<8x32xf32>, vector<8x32xf32> -> vector<8x32xf32>
    %59 = arith.truncf %58 : vector<8x32xf32> to vector<8x32xbf16>
    %c0_33 = arith.constant 0 : index
    %c0_34 = arith.constant 0 : index
    %60 = vector.load %arg11[%c0_33, %c0_34] : memref<128x32xbf16, #tpu.memory_space<vmem>>, vector<32x32xbf16>
    %cst_35 = arith.constant dense<0.000000e+00> : vector<8x32xf32>
    %61 = tpu.matmul %59, %60, %cst_35 {dimension_numbers = #tpu.dot_dimension_numbers<[1], [0], [0], [1], [0, 0, 1, 1], [], []>} : vector<8x32xbf16>, vector<32x32xbf16>, vector<8x32xf32> -> vector<8x32xf32>
    %62 = arith.addf %42, %61 : vector<8x32xf32>
    %63 = vector.extract_strided_slice %29 {offsets = [0, 32], sizes = [8, 32], strides = [1, 1]} : vector<8x128xf32> to vector<8x32xf32>
    %64 = vector.extract_strided_slice %34 {offsets = [0, 32], sizes = [8, 32], strides = [1, 1]} : vector<8x128xf32> to vector<8x32xf32>
    %65 = vector.extract_strided_slice %39 {offsets = [0, 32], sizes = [8, 32], strides = [1, 1]} : vector<8x128xf32> to vector<8x32xf32>
    %cst_36 = arith.constant dense<0.000000e+00> : vector<8x8xf32>
    %66 = tpu.matmul %63, %64, %cst_36 {dimension_numbers = #tpu.dot_dimension_numbers<[1], [1], [0], [0], [0, 0, 1, 0], [], []>} : vector<8x32xf32>, vector<8x32xf32>, vector<8x8xf32> -> vector<8x8xf32>
    %67 = arith.addf %66, %41 : vector<8x8xf32>
    %cst_37 = arith.constant dense<0xFF800000> : vector<8xf32>
    %68 = vector.multi_reduction <maximumf>, %67, %cst_37 [1] : vector<8x8xf32> to vector<8xf32>
    %69 = vector.shape_cast %68 : vector<8xf32> to vector<8x1xf32>
    %70 = vector.broadcast %69 : vector<8x1xf32> to vector<8x8xf32>
    %71 = arith.subf %67, %70 : vector<8x8xf32>
    %72 = math.exp %71 : vector<8x8xf32>
    %cst_38 = arith.constant dense<0.000000e+00> : vector<8xf32>
    %73 = vector.multi_reduction <add>, %72, %cst_38 [1] : vector<8x8xf32> to vector<8xf32>
    %74 = vector.shape_cast %73 : vector<8xf32> to vector<8x1xf32>
    %75 = tpu.reciprocal %74 {approx = true} : vector<8x1xf32> -> vector<8x1xf32>
    %76 = vector.broadcast %75 : vector<8x1xf32> to vector<8x8xf32>
    %77 = arith.mulf %72, %76 : vector<8x8xf32>
    %cst_39 = arith.constant dense<0.000000e+00> : vector<8x32xf32>
    %78 = tpu.matmul %77, %65, %cst_39 {dimension_numbers = #tpu.dot_dimension_numbers<[1], [0], [0], [1], [0, 0, 1, 1], [], []>} : vector<8x8xf32>, vector<8x32xf32>, vector<8x32xf32> -> vector<8x32xf32>
    %79 = arith.truncf %78 : vector<8x32xf32> to vector<8x32xbf16>
    %c32 = arith.constant 32 : index
    %c0_40 = arith.constant 0 : index
    %80 = vector.load %arg11[%c32, %c0_40] : memref<128x32xbf16, #tpu.memory_space<vmem>>, vector<32x32xbf16>
    %cst_41 = arith.constant dense<0.000000e+00> : vector<8x32xf32>
    %81 = tpu.matmul %79, %80, %cst_41 {dimension_numbers = #tpu.dot_dimension_numbers<[1], [0], [0], [1], [0, 0, 1, 1], [], []>} : vector<8x32xbf16>, vector<32x32xbf16>, vector<8x32xf32> -> vector<8x32xf32>
    %82 = arith.addf %62, %81 : vector<8x32xf32>
    %83 = vector.extract_strided_slice %29 {offsets = [0, 64], sizes = [8, 32], strides = [1, 1]} : vector<8x128xf32> to vector<8x32xf32>
    %84 = vector.extract_strided_slice %34 {offsets = [0, 64], sizes = [8, 32], strides = [1, 1]} : vector<8x128xf32> to vector<8x32xf32>
    %85 = vector.extract_strided_slice %39 {offsets = [0, 64], sizes = [8, 32], strides = [1, 1]} : vector<8x128xf32> to vector<8x32xf32>
    %cst_42 = arith.constant dense<0.000000e+00> : vector<8x8xf32>
    %86 = tpu.matmul %83, %84, %cst_42 {dimension_numbers = #tpu.dot_dimension_numbers<[1], [1], [0], [0], [0, 0, 1, 0], [], []>} : vector<8x32xf32>, vector<8x32xf32>, vector<8x8xf32> -> vector<8x8xf32>
    %87 = arith.addf %86, %41 : vector<8x8xf32>
    %cst_43 = arith.constant dense<0xFF800000> : vector<8xf32>
    %88 = vector.multi_reduction <maximumf>, %87, %cst_43 [1] : vector<8x8xf32> to vector<8xf32>
    %89 = vector.shape_cast %88 : vector<8xf32> to vector<8x1xf32>
    %90 = vector.broadcast %89 : vector<8x1xf32> to vector<8x8xf32>
    %91 = arith.subf %87, %90 : vector<8x8xf32>
    %92 = math.exp %91 : vector<8x8xf32>
    %cst_44 = arith.constant dense<0.000000e+00> : vector<8xf32>
    %93 = vector.multi_reduction <add>, %92, %cst_44 [1] : vector<8x8xf32> to vector<8xf32>
    %94 = vector.shape_cast %93 : vector<8xf32> to vector<8x1xf32>
    %95 = tpu.reciprocal %94 {approx = true} : vector<8x1xf32> -> vector<8x1xf32>
    %96 = vector.broadcast %95 : vector<8x1xf32> to vector<8x8xf32>
    %97 = arith.mulf %92, %96 : vector<8x8xf32>
    %cst_45 = arith.constant dense<0.000000e+00> : vector<8x32xf32>
    %98 = tpu.matmul %97, %85, %cst_45 {dimension_numbers = #tpu.dot_dimension_numbers<[1], [0], [0], [1], [0, 0, 1, 1], [], []>} : vector<8x8xf32>, vector<8x32xf32>, vector<8x32xf32> -> vector<8x32xf32>
    %99 = arith.truncf %98 : vector<8x32xf32> to vector<8x32xbf16>
    %c64 = arith.constant 64 : index
    %c0_46 = arith.constant 0 : index
    %100 = vector.load %arg11[%c64, %c0_46] : memref<128x32xbf16, #tpu.memory_space<vmem>>, vector<32x32xbf16>
    %cst_47 = arith.constant dense<0.000000e+00> : vector<8x32xf32>
    %101 = tpu.matmul %99, %100, %cst_47 {dimension_numbers = #tpu.dot_dimension_numbers<[1], [0], [0], [1], [0, 0, 1, 1], [], []>} : vector<8x32xbf16>, vector<32x32xbf16>, vector<8x32xf32> -> vector<8x32xf32>
    %102 = arith.addf %82, %101 : vector<8x32xf32>
    %103 = vector.extract_strided_slice %29 {offsets = [0, 96], sizes = [8, 32], strides = [1, 1]} : vector<8x128xf32> to vector<8x32xf32>
    %104 = vector.extract_strided_slice %34 {offsets = [0, 96], sizes = [8, 32], strides = [1, 1]} : vector<8x128xf32> to vector<8x32xf32>
    %105 = vector.extract_strided_slice %39 {offsets = [0, 96], sizes = [8, 32], strides = [1, 1]} : vector<8x128xf32> to vector<8x32xf32>
    %cst_48 = arith.constant dense<0.000000e+00> : vector<8x8xf32>
    %106 = tpu.matmul %103, %104, %cst_48 {dimension_numbers = #tpu.dot_dimension_numbers<[1], [1], [0], [0], [0, 0, 1, 0], [], []>} : vector<8x32xf32>, vector<8x32xf32>, vector<8x8xf32> -> vector<8x8xf32>
    %107 = arith.addf %106, %41 : vector<8x8xf32>
    %cst_49 = arith.constant dense<0xFF800000> : vector<8xf32>
    %108 = vector.multi_reduction <maximumf>, %107, %cst_49 [1] : vector<8x8xf32> to vector<8xf32>
    %109 = vector.shape_cast %108 : vector<8xf32> to vector<8x1xf32>
    %110 = vector.broadcast %109 : vector<8x1xf32> to vector<8x8xf32>
    %111 = arith.subf %107, %110 : vector<8x8xf32>
    %112 = math.exp %111 : vector<8x8xf32>
    %cst_50 = arith.constant dense<0.000000e+00> : vector<8xf32>
    %113 = vector.multi_reduction <add>, %112, %cst_50 [1] : vector<8x8xf32> to vector<8xf32>
    %114 = vector.shape_cast %113 : vector<8xf32> to vector<8x1xf32>
    %115 = tpu.reciprocal %114 {approx = true} : vector<8x1xf32> -> vector<8x1xf32>
    %116 = vector.broadcast %115 : vector<8x1xf32> to vector<8x8xf32>
    %117 = arith.mulf %112, %116 : vector<8x8xf32>
    %cst_51 = arith.constant dense<0.000000e+00> : vector<8x32xf32>
    %118 = tpu.matmul %117, %105, %cst_51 {dimension_numbers = #tpu.dot_dimension_numbers<[1], [0], [0], [1], [0, 0, 1, 1], [], []>} : vector<8x8xf32>, vector<8x32xf32>, vector<8x32xf32> -> vector<8x32xf32>
    %119 = arith.truncf %118 : vector<8x32xf32> to vector<8x32xbf16>
    %c96 = arith.constant 96 : index
    %c0_52 = arith.constant 0 : index
    %120 = vector.load %arg11[%c96, %c0_52] : memref<128x32xbf16, #tpu.memory_space<vmem>>, vector<32x32xbf16>
    %cst_53 = arith.constant dense<0.000000e+00> : vector<8x32xf32>
    %121 = tpu.matmul %119, %120, %cst_53 {dimension_numbers = #tpu.dot_dimension_numbers<[1], [0], [0], [1], [0, 0, 1, 1], [], []>} : vector<8x32xbf16>, vector<32x32xbf16>, vector<8x32xf32> -> vector<8x32xf32>
    %122 = arith.addf %102, %121 : vector<8x32xf32>
    %123 = arith.addf %1, %122 : vector<8x32xf32>
    %c0_54 = arith.constant 0 : index
    %c0_55 = arith.constant 0 : index
    %124 = vector.load %arg12[%c0_54, %c0_55] : memref<1x32xf32, #tpu.memory_space<vmem>>, vector<1x32xf32>
    %125 = vector.broadcast %124 : vector<1x32xf32> to vector<8x32xf32>
    %126 = arith.addf %123, %125 : vector<8x32xf32>
    %c0_56 = arith.constant 0 : index
    %c0_57 = arith.constant 0 : index
    %127 = vector.load %arg13[%c0_56, %c0_57] : memref<1x32xf32, #tpu.memory_space<vmem>>, vector<1x32xf32>
    %c0_58 = arith.constant 0 : index
    %c0_59 = arith.constant 0 : index
    %128 = vector.load %arg14[%c0_58, %c0_59] : memref<1x32xf32, #tpu.memory_space<vmem>>, vector<1x32xf32>
    %cst_60 = arith.constant dense<0.000000e+00> : vector<8xf32>
    %129 = vector.multi_reduction <add>, %126, %cst_60 [1] : vector<8x32xf32> to vector<8xf32>
    %130 = vector.shape_cast %129 : vector<8xf32> to vector<8x1xf32>
    %cst_61 = arith.constant 3.200000e+01 : f32
    %131 = vector.broadcast %cst_61 : f32 to vector<8x1xf32>
    %132 = arith.divf %130, %131 : vector<8x1xf32>
    %133 = vector.broadcast %132 : vector<8x1xf32> to vector<8x32xf32>
    %134 = arith.subf %126, %133 : vector<8x32xf32>
    %135 = arith.mulf %134, %134 : vector<8x32xf32>
    %cst_62 = arith.constant dense<0.000000e+00> : vector<8xf32>
    %136 = vector.multi_reduction <add>, %135, %cst_62 [1] : vector<8x32xf32> to vector<8xf32>
    %137 = vector.shape_cast %136 : vector<8xf32> to vector<8x1xf32>
    %cst_63 = arith.constant 0.0322580636 : f32
    %138 = vector.broadcast %cst_63 : f32 to vector<8x1xf32>
    %139 = arith.mulf %137, %138 : vector<8x1xf32>
    %140 = math.sqrt %139 : vector<8x1xf32>
    %141 = vector.broadcast %127 : vector<1x32xf32> to vector<8x32xf32>
    %142 = arith.mulf %141, %134 : vector<8x32xf32>
    %cst_64 = arith.constant 9.99999997E-7 : f32
    %143 = vector.broadcast %cst_64 : f32 to vector<8x1xf32>
    %144 = arith.addf %140, %143 : vector<8x1xf32>
    %145 = vector.broadcast %144 : vector<8x1xf32> to vector<8x32xf32>
    %146 = arith.divf %142, %145 : vector<8x32xf32>
    %147 = vector.broadcast %128 : vector<1x32xf32> to vector<8x32xf32>
    %148 = arith.addf %146, %147 : vector<8x32xf32>
    %149 = arith.truncf %148 : vector<8x32xf32> to vector<8x32xbf16>
    %c0_65 = arith.constant 0 : index
    %c0_66 = arith.constant 0 : index
    %150 = vector.load %arg15[%c0_65, %c0_66] : memref<32x64xbf16, #tpu.memory_space<vmem>>, vector<32x64xbf16>
    %cst_67 = arith.constant dense<0.000000e+00> : vector<8x64xf32>
    %151 = tpu.matmul %149, %150, %cst_67 {dimension_numbers = #tpu.dot_dimension_numbers<[1], [0], [0], [1], [0, 0, 1, 1], [], []>} : vector<8x32xbf16>, vector<32x64xbf16>, vector<8x64xf32> -> vector<8x64xf32>
    %c0_68 = arith.constant 0 : index
    %c0_69 = arith.constant 0 : index
    %152 = vector.load %arg16[%c0_68, %c0_69] : memref<1x64xf32, #tpu.memory_space<vmem>>, vector<1x64xf32>
    %153 = vector.broadcast %152 : vector<1x64xf32> to vector<8x64xf32>
    %154 = arith.addf %151, %153 : vector<8x64xf32>
    %cst_70 = arith.constant 0.000000e+00 : f32
    %155 = vector.broadcast %cst_70 : f32 to vector<8x64xf32>
    %156 = arith.maximumf %154, %155 : vector<8x64xf32>
    %157 = arith.truncf %156 : vector<8x64xf32> to vector<8x64xbf16>
    %c0_71 = arith.constant 0 : index
    %c0_72 = arith.constant 0 : index
    %158 = vector.load %arg17[%c0_71, %c0_72] : memref<64x32xbf16, #tpu.memory_space<vmem>>, vector<64x32xbf16>
    %cst_73 = arith.constant dense<0.000000e+00> : vector<8x32xf32>
    %159 = tpu.matmul %157, %158, %cst_73 {dimension_numbers = #tpu.dot_dimension_numbers<[1], [0], [0], [1], [0, 0, 1, 1], [], []>} : vector<8x64xbf16>, vector<64x32xbf16>, vector<8x32xf32> -> vector<8x32xf32>
    %c0_74 = arith.constant 0 : index
    %c0_75 = arith.constant 0 : index
    %160 = vector.load %arg18[%c0_74, %c0_75] : memref<1x32xf32, #tpu.memory_space<vmem>>, vector<1x32xf32>
    %161 = vector.broadcast %160 : vector<1x32xf32> to vector<8x32xf32>
    %162 = arith.addf %159, %161 : vector<8x32xf32>
    %163 = arith.addf %126, %162 : vector<8x32xf32>
    %c0_76 = arith.constant 0 : index
    %c0_77 = arith.constant 0 : index
    %c0_78 = arith.constant 0 : index
    %164 = vector.load %arg19[%c0_76, %c0_77, %c0_78] : memref<1x8x32xf32, #tpu.memory_space<vmem>>, vector<1x8x32xf32>
    %165 = vector.shape_cast %164 : vector<1x8x32xf32> to vector<8x32xf32>
    %166 = vector.shape_cast %163 : vector<8x32xf32> to vector<1x8x32xf32>
    tpu.vector_store %arg19[%c0_76, %c0_77, %c0_78], %166 {strides = array<i32>} : memref<1x8x32xf32, #tpu.memory_space<vmem>>, vector<1x8x32xf32>,
    return
  }
  func.func @transform_0(%arg0: i32) -> (i32, i32, i32) {
    %c0_i32 = arith.constant 0 : i32
    %c0_i32_0 = arith.constant 0 : i32
    %c0_i32_1 = arith.constant 0 : i32
    return %arg0, %c0_i32, %c0_i32_0 : i32, i32, i32
  }
  func.func @transform_1(%arg0: i32) -> (i32, i32, i32) {
    %c0_i32 = arith.constant 0 : i32
    %c0_i32_0 = arith.constant 0 : i32
    %c0_i32_1 = arith.constant 0 : i32
    return %arg0, %c0_i32, %c0_i32_0 : i32, i32, i32
  }
  func.func @transform_2(%arg0: i32) -> (i32, i32) {
    %c0_i32 = arith.constant 0 : i32
    %c0_i32_0 = arith.constant 0 : i32
    %c0_i32_1 = arith.constant 0 : i32
    return %c0_i32, %c0_i32_0 : i32, i32
  }
  func.func @transform_3(%arg0: i32) -> (i32, i32) {
    %c0_i32 = arith.constant 0 : i32
    %c0_i32_0 = arith.constant 0 : i32
    %c0_i32_1 = arith.constant 0 : i32
    return %c0_i32, %c0_i32_0 : i32, i32
  }
  func.func @transform_4(%arg0: i32) -> (i32, i32) {
    %c0_i32 = arith.constant 0 : i32
    %c0_i32_0 = arith.constant 0 : i32
    %c0_i32_1 = arith.constant 0 : i32
    return %c0_i32, %c0_i32_0 : i32, i32
  }
  func.func @transform_5(%arg0: i32) -> (i32, i32) {
    %c0_i32 = arith.constant 0 : i32
    %c0_i32_0 = arith.constant 0 : i32
    %c0_i32_1 = arith.constant 0 : i32
    return %c0_i32, %c0_i32_0 : i32, i32
  }
  func.func @transform_6(%arg0: i32) -> (i32, i32) {
    %c0_i32 = arith.constant 0 : i32
    %c0_i32_0 = arith.constant 0 : i32
    %c0_i32_1 = arith.constant 0 : i32
    return %c0_i32, %c0_i32_0 : i32, i32
  }
  func.func @transform_7(%arg0: i32) -> (i32, i32) {
    %c0_i32 = arith.constant 0 : i32
    %c0_i32_0 = arith.constant 0 : i32
    %c0_i32_1 = arith.constant 0 : i32
    return %c0_i32, %c0_i32_0 : i32, i32
  }
  func.func @transform_8(%arg0: i32) -> (i32, i32) {
    %c0_i32 = arith.constant 0 : i32
    %c0_i32_0 = arith.constant 0 : i32
    %c0_i32_1 = arith.constant 0 : i32
    return %c0_i32, %c0_i32_0 : i32, i32
  }
  func.func @transform_9(%arg0: i32) -> (i32, i32) {
    %c0_i32 = arith.constant 0 : i32
    %c0_i32_0 = arith.constant 0 : i32
    %c0_i32_1 = arith.constant 0 : i32
    return %c0_i32, %c0_i32_0 : i32, i32
  }
  func.func @transform_10(%arg0: i32) -> (i32, i32) {
    %c0_i32 = arith.constant 0 : i32
    %c0_i32_0 = arith.constant 0 : i32
    %c0_i32_1 = arith.constant 0 : i32
    return %c0_i32, %c0_i32_0 : i32, i32
  }
  func.func @transform_11(%arg0: i32) -> (i32, i32) {
    %c0_i32 = arith.constant 0 : i32
    %c0_i32_0 = arith.constant 0 : i32
    %c0_i32_1 = arith.constant 0 : i32
    return %c0_i32, %c0_i32_0 : i32, i32
  }
  func.func @transform_12(%arg0: i32) -> (i32, i32) {
    %c0_i32 = arith.constant 0 : i32
    %c0_i32_0 = arith.constant 0 : i32
    %c0_i32_1 = arith.constant 0 : i32
    return %c0_i32, %c0_i32_0 : i32, i32
  }
  func.func @transform_13(%arg0: i32) -> (i32, i32) {
    %c0_i32 = arith.constant 0 : i32
    %c0_i32_0 = arith.constant 0 : i32
    %c0_i32_1 = arith.constant 0 : i32
    return %c0_i32, %c0_i32_0 : i32, i32
  }
  func.func @transform_14(%arg0: i32) -> (i32, i32) {
    %c0_i32 = arith.constant 0 : i32
    %c0_i32_0 = arith.constant 0 : i32
    %c0_i32_1 = arith.constant 0 : i32
    return %c0_i32, %c0_i32_0 : i32, i32
  }
  func.func @transform_15(%arg0: i32) -> (i32, i32) {
    %c0_i32 = arith.constant 0 : i32
    %c0_i32_0 = arith.constant 0 : i32
    %c0_i32_1 = arith.constant 0 : i32
    return %c0_i32, %c0_i32_0 : i32, i32
  }
  func.func @transform_16(%arg0: i32) -> (i32, i32) {
    %c0_i32 = arith.constant 0 : i32
    %c0_i32_0 = arith.constant 0 : i32
    %c0_i32_1 = arith.constant 0 : i32
    return %c0_i32, %c0_i32_0 : i32, i32
  }
  func.func @transform_17(%arg0: i32) -> (i32, i32) {
    %c0_i32 = arith.constant 0 : i32
    %c0_i32_0 = arith.constant 0 : i32
    %c0_i32_1 = arith.constant 0 : i32
    return %c0_i32, %c0_i32_0 : i32, i32
  }
  func.func @transform_18(%arg0: i32) -> (i32, i32, i32) {
    %c0_i32 = arith.constant 0 : i32
    %c0_i32_0 = arith.constant 0 : i32
    %c0_i32_1 = arith.constant 0 : i32
    return %arg0, %c0_i32, %c0_i32_0 : i32, i32, i32
  }
}

</mosaic_0001>

<llo_original>
// kernel: encoder_layer_forward.1
$region0: #{encoder_layer_forward.1}
  #allocation0 [shape = 'u32[]', space=smem, size = 0x4, offset = 0x4, fixed_abs, tag = 'smem constant byte address 0x4 - core index']
  #allocation1 [shape = 'u32[144,128]{1,0:T(1,128)}', space=vmem, size = 0x12000, scoped, tag = 'internal scratch']
  %s0 = inlined_call_operand.vmem [shape: f32[2,8,32], index: 0, kind: input, shape index: {}]
  %s1 = inlined_call_operand.vmem [shape: f32[2,8,8], index: 1, kind: input, shape index: {}]
  %s2 = inlined_call_operand.vmem [shape: f32[1,32], index: 2, kind: input, shape index: {}]
  %s3 = inlined_call_operand.vmem [shape: f32[1,32], index: 3, kind: input, shape index: {}]
  %s4 = inlined_call_operand.vmem [shape: bf16[32,128], index: 4, kind: input, shape index: {}]
  %s5 = inlined_call_operand.vmem [shape: bf16[32,128], index: 5, kind: input, shape index: {}]
  %s6 = inlined_call_operand.vmem [shape: bf16[32,128], index: 6, kind: input, shape index: {}]
  %s7 = inlined_call_operand.vmem [shape: f32[1,128], index: 7, kind: input, shape index: {}]
  %s8 = inlined_call_operand.vmem [shape: f32[1,128], index: 8, kind: input, shape index: {}]
  %s9 = inlined_call_operand.vmem [shape: f32[1,128], index: 9, kind: input, shape index: {}]
  %s10 = inlined_call_operand.vmem [shape: bf16[128,32], index: 10, kind: input, shape index: {}]
  %s11 = inlined_call_operand.vmem [shape: f32[1,32], index: 11, kind: input, shape index: {}]
  %s12 = inlined_call_operand.vmem [shape: f32[1,32], index: 12, kind: input, shape index: {}]
  %s13 = inlined_call_operand.vmem [shape: f32[1,32], index: 13, kind: input, shape index: {}]
  %s14 = inlined_call_operand.vmem [shape: bf16[32,64], index: 14, kind: input, shape index: {}]
  %s15 = inlined_call_operand.vmem [shape: f32[1,64], index: 15, kind: input, shape index: {}]
  %s16 = inlined_call_operand.vmem [shape: bf16[64,32], index: 16, kind: input, shape index: {}]
  %s17 = inlined_call_operand.vmem [shape: f32[1,32], index: 17, kind: input, shape index: {}]
  %s18 = inlined_call_operand.hbm [shape: f32[2,8,32], index: 18, kind: output, shape index: {}]
  %s19 = sld [smem:[#allocation0]]
  $region105: #{encoder_layer_forward.1} parent=0
    _
  %s21 = ssub.s32 1, %s19
  %s22 = scalar_select 0, %s21, %s19
  $region1: #{encoder_layer_forward.1} parent=0
    #allocation2 [shape = 'u8[8192]{0}', space=vmem, size = 0x2000, scoped, tag = 'output window, operand 0']
    #allocation3 [shape = 's32[2]{0}', space=sflag, size = 0x8, scoped, tag = 'scoped memory for encoder_layer_forward.1']
    %23 = vsyncpa [#allocation3], 0
    %s24 = scalar_lea.sflag [#allocation3], 1
    %25 = vsyncpa %s24, 0
    loop: start=0, step=1, limit=4
    $region2: #{encoder_layer_forward.1} parent=1 // loop_pre_header
      _
    $region3: #{encoder_layer_forward.1} parent=1 // loop_header
      %s27 = sphi 0, %s31
      %p28 = scmp.ge.s32.totalorder %s27, 4
      %s37 = sphi 0, %s39
      %s40 = sphi 0, %s37
      %s41 = sphi 0, %s40
      %s57 = sphi 0, %s41
      %s63 = sphi 0, %s65
      %s66 = sphi 0, %s63
      %s67 = sphi 0, %s66
      %s83 = sphi 0, %s67
      %s87 = sphi 0, %s87
      %s89 = sphi 0, %s87
      %s90 = sphi 0, %s89
      %s104 = sphi 0, %s90
      %s108 = sphi 0, %s108
      %s110 = sphi 0, %s108
      %s111 = sphi 0, %s110
      %s125 = sphi 0, %s111
      %s129 = sphi 0, %s129
      %s131 = sphi 0, %s129
      %s132 = sphi 0, %s131
      %s146 = sphi 0, %s132
      %s150 = sphi 0, %s150
      %s152 = sphi 0, %s150
      %s153 = sphi 0, %s152
      %s167 = sphi 0, %s153
      %s171 = sphi 0, %s171
      %s173 = sphi 0, %s171
      %s174 = sphi 0, %s173
      %s188 = sphi 0, %s174
      %s192 = sphi 0, %s192
      %s194 = sphi 0, %s192
      %s195 = sphi 0, %s194
      %s209 = sphi 0, %s195
      %s213 = sphi 0, %s213
      %s215 = sphi 0, %s213
      %s216 = sphi 0, %s215
      %s230 = sphi 0, %s216
      %s234 = sphi 0, %s234
      %s236 = sphi 0, %s234
      %s237 = sphi 0, %s236
      %s251 = sphi 0, %s237
      %s255 = sphi 0, %s255
      %s257 = sphi 0, %s255
      %s258 = sphi 0, %s257
      %s272 = sphi 0, %s258
      %s276 = sphi 0, %s276
      %s278 = sphi 0, %s276
      %s279 = sphi 0, %s278
      %s293 = sphi 0, %s279
      %s297 = sphi 0, %s297
      %s299 = sphi 0, %s297
      %s300 = sphi 0, %s299
      %s314 = sphi 0, %s300
      %s318 = sphi 0, %s318
      %s320 = sphi 0, %s318
      %s321 = sphi 0, %s320
      %s335 = sphi 0, %s321
      %s339 = sphi 0, %s339
      %s341 = sphi 0, %s339
      %s342 = sphi 0, %s341
      %s356 = sphi 0, %s342
      %s360 = sphi 0, %s360
      %s362 = sphi 0, %s360
      %s363 = sphi 0, %s362
      %s377 = sphi 0, %s363
      %s381 = sphi 0, %s381
      %s383 = sphi 0, %s381
      %s384 = sphi 0, %s383
      %s398 = sphi 0, %s384
      %s402 = sphi 0, %s402
      %s404 = sphi 0, %s402
      %s405 = sphi 0, %s404
      %s419 = sphi 0, %s405
      %s425 = sphi 0, %s427
      %s428 = sphi 0, %s425
      %s429 = sphi 0, %s428
      %s445 = sphi 0, %s429
    $region4: #{encoder_layer_forward.1} parent=1 // loop_header_branch
      %30 = sbr.rel (%p28) target = $region8
    $region5: #{encoder_layer_forward.1} parent=1 // loop_body
      %s32 = ssub.s32 %s27, 1
      %s33 = ssub.s32 %s27, 2
      %s34 = sadd.s32 %s27, 1
      %s35 = ssub.s32 %s27, %s34
      %p36 = scmp.eq.s32.totalorder %s35, 0
      %s38 = sadd.s32 %s37, 1
      %s39 = scalar_select %p36, %s37, %s38
      %p42 = pneg %p36
      %p43 = scmp.eq.s32.totalorder %s27, 1
      %p44 = por %p42, %p43
      %p45 = scmp.ne.s32.totalorder %s37, %s40
      %p46 = scmp.eq.s32.totalorder %s27, 0
      %p47 = por %p45, %p46
      %p48 = scmp.ne.s32.totalorder %s37, %s40
      %p49 = scmp.eq.s32.totalorder %s32, 1
      %p50 = por %p48, %p49
      %p51 = scmp.ne.s32.totalorder %s40, %s41
      %p52 = scmp.eq.s32.totalorder %s32, 0
      %p53 = por %p51, %p52
      %p54 = scmp.ne.s32.totalorder %s40, %s41
      %p55 = scmp.eq.s32.totalorder %s33, 1
      %p56 = por %p54, %p55
      %p58 = scmp.ne.s32.totalorder %s41, %s57
      %p59 = scmp.eq.s32.totalorder %s33, 0
      %p60 = por %p58, %p59
      %s61 = ssub.s32 %s27, %s34
      %p62 = scmp.eq.s32.totalorder %s61, 0
      %s64 = sadd.s32 %s63, 1
      %s65 = scalar_select %p62, %s63, %s64
      %p68 = pneg %p62
      %p69 = scmp.eq.s32.totalorder %s27, 1
      %p70 = por %p68, %p69
      %p71 = scmp.ne.s32.totalorder %s63, %s66
      %p72 = scmp.eq.s32.totalorder %s27, 0
      %p73 = por %p71, %p72
      %p74 = scmp.ne.s32.totalorder %s63, %s66
      %p75 = scmp.eq.s32.totalorder %s32, 1
      %p76 = por %p74, %p75
      %p77 = scmp.ne.s32.totalorder %s66, %s67
      %p78 = scmp.eq.s32.totalorder %s32, 0
      %p79 = por %p77, %p78
      %p80 = scmp.ne.s32.totalorder %s66, %s67
      %p81 = scmp.eq.s32.totalorder %s33, 1
      %p82 = por %p80, %p81
      %p84 = scmp.ne.s32.totalorder %s67, %s83
      %p85 = scmp.eq.s32.totalorder %s33, 0
      %p86 = por %p84, %p85
      %s88 = sadd.s32 %s87, 1
      %p91 = scmp.eq.s32.totalorder %s27, 1
      %p92 = scmp.ne.s32.totalorder %s87, %s89
      %p93 = scmp.eq.s32.totalorder %s27, 0
      %p94 = por %p92, %p93
      %p95 = scmp.ne.s32.totalorder %s87, %s89
      %p96 = scmp.eq.s32.totalorder %s32, 1
      %p97 = por %p95, %p96
      %p98 = scmp.ne.s32.totalorder %s89, %s90
      %p99 = scmp.eq.s32.totalorder %s32, 0
      %p100 = por %p98, %p99
      %p101 = scmp.ne.s32.totalorder %s89, %s90
      %p102 = scmp.eq.s32.totalorder %s33, 1
      %p103 = por %p101, %p102
      %p105 = scmp.ne.s32.totalorder %s90, %s104
      %p106 = scmp.eq.s32.totalorder %s33, 0
      %p107 = por %p105, %p106
      %s109 = sadd.s32 %s108, 1
      %p112 = scmp.eq.s32.totalorder %s27, 1
      %p113 = scmp.ne.s32.totalorder %s108, %s110
      %p114 = scmp.eq.s32.totalorder %s27, 0
      %p115 = por %p113, %p114
      %p116 = scmp.ne.s32.totalorder %s108, %s110
      %p117 = scmp.eq.s32.totalorder %s32, 1
      %p118 = por %p116, %p117
      %p119 = scmp.ne.s32.totalorder %s110, %s111
      %p120 = scmp.eq.s32.totalorder %s32, 0
      %p121 = por %p119, %p120
      %p122 = scmp.ne.s32.totalorder %s110, %s111
      %p123 = scmp.eq.s32.totalorder %s33, 1
      %p124 = por %p122, %p123
      %p126 = scmp.ne.s32.totalorder %s111, %s125
      %p127 = scmp.eq.s32.totalorder %s33, 0
      %p128 = por %p126, %p127
      %s130 = sadd.s32 %s129, 1
      %p133 = scmp.eq.s32.totalorder %s27, 1
      %p134 = scmp.ne.s32.totalorder %s129, %s131
      %p135 = scmp.eq.s32.totalorder %s27, 0
      %p136 = por %p134, %p135
      %p137 = scmp.ne.s32.totalorder %s129, %s131
      %p138 = scmp.eq.s32.totalorder %s32, 1
      %p139 = por %p137, %p138
      %p140 = scmp.ne.s32.totalorder %s131, %s132
      %p141 = scmp.eq.s32.totalorder %s32, 0
      %p142 = por %p140, %p141
      %p143 = scmp.ne.s32.totalorder %s131, %s132
      %p144 = scmp.eq.s32.totalorder %s33, 1
      %p145 = por %p143, %p144
      %p147 = scmp.ne.s32.totalorder %s132, %s146
      %p148 = scmp.eq.s32.totalorder %s33, 0
      %p149 = por %p147, %p148
      %s151 = sadd.s32 %s150, 1
      %p154 = scmp.eq.s32.totalorder %s27, 1
      %p155 = scmp.ne.s32.totalorder %s150, %s152
      %p156 = scmp.eq.s32.totalorder %s27, 0
      %p157 = por %p155, %p156
      %p158 = scmp.ne.s32.totalorder %s150, %s152
      %p159 = scmp.eq.s32.totalorder %s32, 1
      %p160 = por %p158, %p159
      %p161 = scmp.ne.s32.totalorder %s152, %s153
      %p162 = scmp.eq.s32.totalorder %s32, 0
      %p163 = por %p161, %p162
      %p164 = scmp.ne.s32.totalorder %s152, %s153
      %p165 = scmp.eq.s32.totalorder %s33, 1
      %p166 = por %p164, %p165
      %p168 = scmp.ne.s32.totalorder %s153, %s167
      %p169 = scmp.eq.s32.totalorder %s33, 0
      %p170 = por %p168, %p169
      %s172 = sadd.s32 %s171, 1
      %p175 = scmp.eq.s32.totalorder %s27, 1
      %p176 = scmp.ne.s32.totalorder %s171, %s173
      %p177 = scmp.eq.s32.totalorder %s27, 0
      %p178 = por %p176, %p177
      %p179 = scmp.ne.s32.totalorder %s171, %s173
      %p180 = scmp.eq.s32.totalorder %s32, 1
      %p181 = por %p179, %p180
      %p182 = scmp.ne.s32.totalorder %s173, %s174
      %p183 = scmp.eq.s32.totalorder %s32, 0
      %p184 = por %p182, %p183
      %p185 = scmp.ne.s32.totalorder %s173, %s174
      %p186 = scmp.eq.s32.totalorder %s33, 1
      %p187 = por %p185, %p186
      %p189 = scmp.ne.s32.totalorder %s174, %s188
      %p190 = scmp.eq.s32.totalorder %s33, 0
      %p191 = por %p189, %p190
      %s193 = sadd.s32 %s192, 1
      %p196 = scmp.eq.s32.totalorder %s27, 1
      %p197 = scmp.ne.s32.totalorder %s192, %s194
      %p198 = scmp.eq.s32.totalorder %s27, 0
      %p199 = por %p197, %p198
      %p200 = scmp.ne.s32.totalorder %s192, %s194
      %p201 = scmp.eq.s32.totalorder %s32, 1
      %p202 = por %p200, %p201
      %p203 = scmp.ne.s32.totalorder %s194, %s195
      %p204 = scmp.eq.s32.totalorder %s32, 0
      %p205 = por %p203, %p204
      %p206 = scmp.ne.s32.totalorder %s194, %s195
      %p207 = scmp.eq.s32.totalorder %s33, 1
      %p208 = por %p206, %p207
      %p210 = scmp.ne.s32.totalorder %s195, %s209
      %p211 = scmp.eq.s32.totalorder %s33, 0
      %p212 = por %p210, %p211
      %s214 = sadd.s32 %s213, 1
      %p217 = scmp.eq.s32.totalorder %s27, 1
      %p218 = scmp.ne.s32.totalorder %s213, %s215
      %p219 = scmp.eq.s32.totalorder %s27, 0
      %p220 = por %p218, %p219
      %p221 = scmp.ne.s32.totalorder %s213, %s215
      %p222 = scmp.eq.s32.totalorder %s32, 1
      %p223 = por %p221, %p222
      %p224 = scmp.ne.s32.totalorder %s215, %s216
      %p225 = scmp.eq.s32.totalorder %s32, 0
      %p226 = por %p224, %p225
      %p227 = scmp.ne.s32.totalorder %s215, %s216
      %p228 = scmp.eq.s32.totalorder %s33, 1
      %p229 = por %p227, %p228
      %p231 = scmp.ne.s32.totalorder %s216, %s230
      %p232 = scmp.eq.s32.totalorder %s33, 0
      %p233 = por %p231, %p232
      %s235 = sadd.s32 %s234, 1
      %p238 = scmp.eq.s32.totalorder %s27, 1
      %p239 = scmp.ne.s32.totalorder %s234, %s236
      %p240 = scmp.eq.s32.totalorder %s27, 0
      %p241 = por %p239, %p240
      %p242 = scmp.ne.s32.totalorder %s234, %s236
      %p243 = scmp.eq.s32.totalorder %s32, 1
      %p244 = por %p242, %p243
      %p245 = scmp.ne.s32.totalorder %s236, %s237
      %p246 = scmp.eq.s32.totalorder %s32, 0
      %p247 = por %p245, %p246
      %p248 = scmp.ne.s32.totalorder %s236, %s237
      %p249 = scmp.eq.s32.totalorder %s33, 1
      %p250 = por %p248, %p249
      %p252 = scmp.ne.s32.totalorder %s237, %s251
      %p253 = scmp.eq.s32.totalorder %s33, 0
      %p254 = por %p252, %p253
      %s256 = sadd.s32 %s255, 1
      %p259 = scmp.eq.s32.totalorder %s27, 1
      %p260 = scmp.ne.s32.totalorder %s255, %s257
      %p261 = scmp.eq.s32.totalorder %s27, 0
      %p262 = por %p260, %p261
      %p263 = scmp.ne.s32.totalorder %s255, %s257
      %p264 = scmp.eq.s32.totalorder %s32, 1
      %p265 = por %p263, %p264
      %p266 = scmp.ne.s32.totalorder %s257, %s258
      %p267 = scmp.eq.s32.totalorder %s32, 0
      %p268 = por %p266, %p267
      %p269 = scmp.ne.s32.totalorder %s257, %s258
      %p270 = scmp.eq.s32.totalorder %s33, 1
      %p271 = por %p269, %p270
      %p273 = scmp.ne.s32.totalorder %s258, %s272
      %p274 = scmp.eq.s32.totalorder %s33, 0
      %p275 = por %p273, %p274
      %s277 = sadd.s32 %s276, 1
      %p280 = scmp.eq.s32.totalorder %s27, 1
      %p281 = scmp.ne.s32.totalorder %s276, %s278
      %p282 = scmp.eq.s32.totalorder %s27, 0
      %p283 = por %p281, %p282
      %p284 = scmp.ne.s32.totalorder %s276, %s278
      %p285 = scmp.eq.s32.totalorder %s32, 1
      %p286 = por %p284, %p285
      %p287 = scmp.ne.s32.totalorder %s278, %s279
      %p288 = scmp.eq.s32.totalorder %s32, 0
      %p289 = por %p287, %p288
      %p290 = scmp.ne.s32.totalorder %s278, %s279
      %p291 = scmp.eq.s32.totalorder %s33, 1
      %p292 = por %p290, %p291
      %p294 = scmp.ne.s32.totalorder %s279, %s293
      %p295 = scmp.eq.s32.totalorder %s33, 0
      %p296 = por %p294, %p295
      %s298 = sadd.s32 %s297, 1
      %p301 = scmp.eq.s32.totalorder %s27, 1
      %p302 = scmp.ne.s32.totalorder %s297, %s299
      %p303 = scmp.eq.s32.totalorder %s27, 0
      %p304 = por %p302, %p303
      %p305 = scmp.ne.s32.totalorder %s297, %s299
      %p306 = scmp.eq.s32.totalorder %s32, 1
      %p307 = por %p305, %p306
      %p308 = scmp.ne.s32.totalorder %s299, %s300
      %p309 = scmp.eq.s32.totalorder %s32, 0
      %p310 = por %p308, %p309
      %p311 = scmp.ne.s32.totalorder %s299, %s300
      %p312 = scmp.eq.s32.totalorder %s33, 1
      %p313 = por %p311, %p312
      %p315 = scmp.ne.s32.totalorder %s300, %s314
      %p316 = scmp.eq.s32.totalorder %s33, 0
      %p317 = por %p315, %p316
      %s319 = sadd.s32 %s318, 1
      %p322 = scmp.eq.s32.totalorder %s27, 1
      %p323 = scmp.ne.s32.totalorder %s318, %s320
      %p324 = scmp.eq.s32.totalorder %s27, 0
      %p325 = por %p323, %p324
      %p326 = scmp.ne.s32.totalorder %s318, %s320
      %p327 = scmp.eq.s32.totalorder %s32, 1
      %p328 = por %p326, %p327
      %p329 = scmp.ne.s32.totalorder %s320, %s321
      %p330 = scmp.eq.s32.totalorder %s32, 0
      %p331 = por %p329, %p330
      %p332 = scmp.ne.s32.totalorder %s320, %s321
      %p333 = scmp.eq.s32.totalorder %s33, 1
      %p334 = por %p332, %p333
      %p336 = scmp.ne.s32.totalorder %s321, %s335
      %p337 = scmp.eq.s32.totalorder %s33, 0
      %p338 = por %p336, %p337
      %s340 = sadd.s32 %s339, 1
      %p343 = scmp.eq.s32.totalorder %s27, 1
      %p344 = scmp.ne.s32.totalorder %s339, %s341
      %p345 = scmp.eq.s32.totalorder %s27, 0
      %p346 = por %p344, %p345
      %p347 = scmp.ne.s32.totalorder %s339, %s341
      %p348 = scmp.eq.s32.totalorder %s32, 1
      %p349 = por %p347, %p348
      %p350 = scmp.ne.s32.totalorder %s341, %s342
      %p351 = scmp.eq.s32.totalorder %s32, 0
      %p352 = por %p350, %p351
      %p353 = scmp.ne.s32.totalorder %s341, %s342
      %p354 = scmp.eq.s32.totalorder %s33, 1
      %p355 = por %p353, %p354
      %p357 = scmp.ne.s32.totalorder %s342, %s356
      %p358 = scmp.eq.s32.totalorder %s33, 0
      %p359 = por %p357, %p358
      %s361 = sadd.s32 %s360, 1
      %p364 = scmp.eq.s32.totalorder %s27, 1
      %p365 = scmp.ne.s32.totalorder %s360, %s362
      %p366 = scmp.eq.s32.totalorder %s27, 0
      %p367 = por %p365, %p366
      %p368 = scmp.ne.s32.totalorder %s360, %s362
      %p369 = scmp.eq.s32.totalorder %s32, 1
      %p370 = por %p368, %p369
      %p371 = scmp.ne.s32.totalorder %s362, %s363
      %p372 = scmp.eq.s32.totalorder %s32, 0
      %p373 = por %p371, %p372
      %p374 = scmp.ne.s32.totalorder %s362, %s363
      %p375 = scmp.eq.s32.totalorder %s33, 1
      %p376 = por %p374, %p375
      %p378 = scmp.ne.s32.totalorder %s363, %s377
      %p379 = scmp.eq.s32.totalorder %s33, 0
      %p380 = por %p378, %p379
      %s382 = sadd.s32 %s381, 1
      %p385 = scmp.eq.s32.totalorder %s27, 1
      %p386 = scmp.ne.s32.totalorder %s381, %s383
      %p387 = scmp.eq.s32.totalorder %s27, 0
      %p388 = por %p386, %p387
      %p389 = scmp.ne.s32.totalorder %s381, %s383
      %p390 = scmp.eq.s32.totalorder %s32, 1
      %p391 = por %p389, %p390
      %p392 = scmp.ne.s32.totalorder %s383, %s384
      %p393 = scmp.eq.s32.totalorder %s32, 0
      %p394 = por %p392, %p393
      %p395 = scmp.ne.s32.totalorder %s383, %s384
      %p396 = scmp.eq.s32.totalorder %s33, 1
      %p397 = por %p395, %p396
      %p399 = scmp.ne.s32.totalorder %s384, %s398
      %p400 = scmp.eq.s32.totalorder %s33, 0
      %p401 = por %p399, %p400
      %s403 = sadd.s32 %s402, 1
      %p406 = scmp.eq.s32.totalorder %s27, 1
      %p407 = scmp.ne.s32.totalorder %s402, %s404
      %p408 = scmp.eq.s32.totalorder %s27, 0
      %p409 = por %p407, %p408
      %p410 = scmp.ne.s32.totalorder %s402, %s404
      %p411 = scmp.eq.s32.totalorder %s32, 1
      %p412 = por %p410, %p411
      %p413 = scmp.ne.s32.totalorder %s404, %s405
      %p414 = scmp.eq.s32.totalorder %s32, 0
      %p415 = por %p413, %p414
      %p416 = scmp.ne.s32.totalorder %s404, %s405
      %p417 = scmp.eq.s32.totalorder %s33, 1
      %p418 = por %p416, %p417
      %p420 = scmp.ne.s32.totalorder %s405, %s419
      %p421 = scmp.eq.s32.totalorder %s33, 0
      %p422 = por %p420, %p421
      %s423 = ssub.s32 %s27, %s34
      %p424 = scmp.eq.s32.totalorder %s423, 0
      %s426 = sadd.s32 %s425, 1
      %s427 = scalar_select %p424, %s425, %s426
      %p430 = pneg %p424
      %p431 = scmp.eq.s32.totalorder %s27, 1
      %p432 = por %p430, %p431
      %p433 = scmp.ne.s32.totalorder %s425, %s428
      %p434 = scmp.eq.s32.totalorder %s27, 0
      %p435 = por %p433, %p434
      %p436 = scmp.ne.s32.totalorder %s425, %s428
      %p437 = scmp.eq.s32.totalorder %s32, 1
      %p438 = por %p436, %p437
      %p439 = scmp.ne.s32.totalorder %s428, %s429
      %p440 = scmp.eq.s32.totalorder %s32, 0
      %p441 = por %p439, %p440
      %p442 = scmp.ne.s32.totalorder %s428, %s429
      %p443 = scmp.eq.s32.totalorder %s33, 1
      %p444 = por %p442, %p443
      %p446 = scmp.ne.s32.totalorder %s429, %s445
      %p447 = scmp.eq.s32.totalorder %s33, 0
      %p448 = por %p446, %p447
      %p449 = scmp.le.s32.totalorder 1, %s27
      %p450 = scmp.lt.s32.totalorder %s27, 3
      %p451 = pnand %p449, %p450
      %p452 = pneg %p451
      // Predicated region
      $region9: #{encoder_layer_forward.1} parent=5 // pred_check
        _
      $region10: #{encoder_layer_forward.1} parent=5 // pred_check_branch
        %454 = sbr.rel (%p451) target = $region12
      $region11: #{encoder_layer_forward.1} parent=5 // pred_region
        %s455 = ssub.s32 %s27, 1
        // Predicated region
        $region13: #{encoder_layer_forward.1} parent=11 // pred_check
          %p456 = pneg %p100
        $region14: #{encoder_layer_forward.1} parent=11 // pred_check_branch
          %458 = sbr.rel (%p456) target = $region16
        $region15: #{encoder_layer_forward.1} parent=11 // pred_region
          _
        $region16: #{encoder_layer_forward.1} parent=11 // pred_fallthru
          _
        // Predicated region
        $region17: #{encoder_layer_forward.1} parent=11 // pred_check
          %p459 = pneg %p121
        $region18: #{encoder_layer_forward.1} parent=11 // pred_check_branch
          %461 = sbr.rel (%p459) target = $region20
        $region19: #{encoder_layer_forward.1} parent=11 // pred_region
          _
        $region20: #{encoder_layer_forward.1} parent=11 // pred_fallthru
          _
        // Predicated region
        $region21: #{encoder_layer_forward.1} parent=11 // pred_check
          %p462 = pneg %p142
        $region22: #{encoder_layer_forward.1} parent=11 // pred_check_branch
          %464 = sbr.rel (%p462) target = $region24
        $region23: #{encoder_layer_forward.1} parent=11 // pred_region
          _
        $region24: #{encoder_layer_forward.1} parent=11 // pred_fallthru
          _
        // Predicated region
        $region25: #{encoder_layer_forward.1} parent=11 // pred_check
          %p465 = pneg %p163
        $region26: #{encoder_layer_forward.1} parent=11 // pred_check_branch
          %467 = sbr.rel (%p465) target = $region28
        $region27: #{encoder_layer_forward.1} parent=11 // pred_region
          _
        $region28: #{encoder_layer_forward.1} parent=11 // pred_fallthru
          _
        // Predicated region
        $region29: #{encoder_layer_forward.1} parent=11 // pred_check
          %p468 = pneg %p184
        $region30: #{encoder_layer_forward.1} parent=11 // pred_check_branch
          %470 = sbr.rel (%p468) target = $region32
        $region31: #{encoder_layer_forward.1} parent=11 // pred_region
          _
        $region32: #{encoder_layer_forward.1} parent=11 // pred_fallthru
          _
        // Predicated region
        $region33: #{encoder_layer_forward.1} parent=11 // pred_check
          %p471 = pneg %p205
        $region34: #{encoder_layer_forward.1} parent=11 // pred_check_branch
          %473 = sbr.rel (%p471) target = $region36
        $region35: #{encoder_layer_forward.1} parent=11 // pred_region
          _
        $region36: #{encoder_layer_forward.1} parent=11 // pred_fallthru
          _
        // Predicated region
        $region37: #{encoder_layer_forward.1} parent=11 // pred_check
          %p474 = pneg %p226
        $region38: #{encoder_layer_forward.1} parent=11 // pred_check_branch
          %476 = sbr.rel (%p474) target = $region40
        $region39: #{encoder_layer_forward.1} parent=11 // pred_region
          _
        $region40: #{encoder_layer_forward.1} parent=11 // pred_fallthru
          _
        // Predicated region
        $region41: #{encoder_layer_forward.1} parent=11 // pred_check
          %p477 = pneg %p247
        $region42: #{encoder_layer_forward.1} parent=11 // pred_check_branch
          %479 = sbr.rel (%p477) target = $region44
        $region43: #{encoder_layer_forward.1} parent=11 // pred_region
          _
        $region44: #{encoder_layer_forward.1} parent=11 // pred_fallthru
          _
        // Predicated region
        $region45: #{encoder_layer_forward.1} parent=11 // pred_check
          %p480 = pneg %p268
        $region46: #{encoder_layer_forward.1} parent=11 // pred_check_branch
          %482 = sbr.rel (%p480) target = $region48
        $region47: #{encoder_layer_forward.1} parent=11 // pred_region
          _
        $region48: #{encoder_layer_forward.1} parent=11 // pred_fallthru
          _
        // Predicated region
        $region49: #{encoder_layer_forward.1} parent=11 // pred_check
          %p483 = pneg %p289
        $region50: #{encoder_layer_forward.1} parent=11 // pred_check_branch
          %485 = sbr.rel (%p483) target = $region52
        $region51: #{encoder_layer_forward.1} parent=11 // pred_region
          _
        $region52: #{encoder_layer_forward.1} parent=11 // pred_fallthru
          _
        // Predicated region
        $region53: #{encoder_layer_forward.1} parent=11 // pred_check
          %p486 = pneg %p310
        $region54: #{encoder_layer_forward.1} parent=11 // pred_check_branch
          %488 = sbr.rel (%p486) target = $region56
        $region55: #{encoder_layer_forward.1} parent=11 // pred_region
          _
        $region56: #{encoder_layer_forward.1} parent=11 // pred_fallthru
          _
        // Predicated region
        $region57: #{encoder_layer_forward.1} parent=11 // pred_check
          %p489 = pneg %p331
        $region58: #{encoder_layer_forward.1} parent=11 // pred_check_branch
          %491 = sbr.rel (%p489) target = $region60
        $region59: #{encoder_layer_forward.1} parent=11 // pred_region
          _
        $region60: #{encoder_layer_forward.1} parent=11 // pred_fallthru
          _
        // Predicated region
        $region61: #{encoder_layer_forward.1} parent=11 // pred_check
          %p492 = pneg %p352
        $region62: #{encoder_layer_forward.1} parent=11 // pred_check_branch
          %494 = sbr.rel (%p492) target = $region64
        $region63: #{encoder_layer_forward.1} parent=11 // pred_region
          _
        $region64: #{encoder_layer_forward.1} parent=11 // pred_fallthru
          _
        // Predicated region
        $region65: #{encoder_layer_forward.1} parent=11 // pred_check
          %p495 = pneg %p373
        $region66: #{encoder_layer_forward.1} parent=11 // pred_check_branch
          %497 = sbr.rel (%p495) target = $region68
        $region67: #{encoder_layer_forward.1} parent=11 // pred_region
          _
        $region68: #{encoder_layer_forward.1} parent=11 // pred_fallthru
          _
        // Predicated region
        $region69: #{encoder_layer_forward.1} parent=11 // pred_check
          %p498 = pneg %p394
        $region70: #{encoder_layer_forward.1} parent=11 // pred_check_branch
          %500 = sbr.rel (%p498) target = $region72
        $region71: #{encoder_layer_forward.1} parent=11 // pred_region
          _
        $region72: #{encoder_layer_forward.1} parent=11 // pred_fallthru
          _
        // Predicated region
        $region73: #{encoder_layer_forward.1} parent=11 // pred_check
          %p501 = pneg %p415
        $region74: #{encoder_layer_forward.1} parent=11 // pred_check_branch
          %503 = sbr.rel (%p501) target = $region76
        $region75: #{encoder_layer_forward.1} parent=11 // pred_region
          _
        $region76: #{encoder_layer_forward.1} parent=11 // pred_fallthru
          _
      $region12: #{encoder_layer_forward.1} parent=5 // pred_fallthru
        _
      %p504 = scmp.lt.s32.totalorder %s27, 2
      // Predicated region
      $region77: #{encoder_layer_forward.1} parent=5 // pred_check
        %p505 = pneg %p504
      $region78: #{encoder_layer_forward.1} parent=5 // pred_check_branch
        %507 = sbr.rel (%p505) target = $region80
      $region79: #{encoder_layer_forward.1} parent=5 // pred_region
        // Predicated region
        $region81: #{encoder_layer_forward.1} parent=79 // pred_check
          %p508 = pneg %p47
        $region82: #{encoder_layer_forward.1} parent=79 // pred_check_branch
          %510 = sbr.rel (%p508) target = $region84
        $region83: #{encoder_layer_forward.1} parent=79 // pred_region
          %p511 = scmp.lt.s32.totalorder %s27, 1
          %s512 = scalar_select %p511, %s27, 1
          %s513 = smul.addr %s512, 8
          %s514 = scalar_lea.vmem %s0, %s513
        $region84: #{encoder_layer_forward.1} parent=79 // pred_fallthru
          _
        // Predicated region
        $region85: #{encoder_layer_forward.1} parent=79 // pred_check
          %p515 = pneg %p73
        $region86: #{encoder_layer_forward.1} parent=79 // pred_check_branch
          %517 = sbr.rel (%p515) target = $region88
        $region87: #{encoder_layer_forward.1} parent=79 // pred_region
          %p518 = scmp.lt.s32.totalorder %s27, 1
          %s519 = scalar_select %p518, %s27, 1
          %s520 = smul.addr %s519, 8
          %s521 = scalar_lea.vmem %s1, %s520
        $region88: #{encoder_layer_forward.1} parent=79 // pred_fallthru
          _
      $region80: #{encoder_layer_forward.1} parent=5 // pred_fallthru
        _
      %p522 = scmp.le.s32.totalorder 1, %s27
      %p523 = scmp.lt.s32.totalorder %s27, 3
      %p524 = pnand %p522, %p523
      %p525 = pneg %p524
      // Predicated region
      $region89: #{encoder_layer_forward.1} parent=5 // pred_check
        _
      $region90: #{encoder_layer_forward.1} parent=5 // pred_check_branch
        %527 = sbr.rel (%p524) target = $region92
      $region91: #{encoder_layer_forward.1} parent=5 // pred_region
        %s528 = ssub.s32 %s27, 1
        %p529 = scmp.lt.s32.totalorder %s32, 1
        %s530 = scalar_select %p529, %s32, 1
        %s531 = smul.addr %s530, 8
        %s532 = scalar_lea.vmem %s0, %s531
        %p533 = pneg %p53
        %p534 = pneg %p50
        %p535 = scmp.lt.s32.totalorder %s32, 1
        %s536 = scalar_select %p535, %s32, 1
        %s537 = smul.addr %s536, 8
        %s538 = scalar_lea.vmem %s1, %s537
        %p539 = pneg %p79
        %p540 = pneg %p76
        %p541 = pneg %p100
        %p542 = pneg %p97
        %p543 = pneg %p121
        %p544 = pneg %p118
        %p545 = pneg %p142
        %p546 = pneg %p139
        %p547 = pneg %p163
        %p548 = pneg %p160
        %p549 = pneg %p184
        %p550 = pneg %p181
        %p551 = pneg %p205
        %p552 = pneg %p202
        %p553 = pneg %p226
        %p554 = pneg %p223
        %p555 = pneg %p247
        %p556 = pneg %p244
        %p557 = pneg %p268
        %p558 = pneg %p265
        %p559 = pneg %p289
        %p560 = pneg %p286
        %p561 = pneg %p310
        %p562 = pneg %p307
        %p563 = pneg %p331
        %p564 = pneg %p328
        %p565 = pneg %p352
        %p566 = pneg %p349
        %p567 = pneg %p373
        %p568 = pneg %p370
        %p569 = pneg %p394
        %p570 = pneg %p391
        %p571 = pneg %p415
        %p572 = pneg %p412
        %p573 = pneg %p441
        %p574 = pneg %p438
        %s575 = sand.u32 %s428, 1
        %s576 = scalar_lea.sflag [#allocation3], %s575
        %s577 = sand.u32 %s428, 1
        %s578 = smul.addr %s577, 8
        %s579 = scalar_lea.vmem [#allocation2], %s578
        %p580 = scmp.lt.s32.totalorder %s32, 1
        %s581 = scalar_select %p580, %s32, 1
        %s582 = smul.addr %s581, 8
        %s583 = scalar_lea.vmem %s0, %s582
        %p584 = scmp.lt.s32.totalorder %s32, 1
        %s585 = scalar_select %p584, %s32, 1
        %s586 = smul.addr %s585, 8
        %s587 = scalar_lea.vmem %s1, %s586
        %v589 = vld [vmem:[%s583] sm:$0xff]
        %v590 = vld [vmem:[%s2] sm:$0x1]
        %v591 = vld [vmem:[%s3] sm:$0x1]
        %vm592 = vcmask 261120
        %v593 = vsel %vm592, %v589, 0.0
        %594 = vadd.xlane.f32.xlu0 %v593
        %v595 = vpop.xlane.xlu0 %594
        %v596 = vrcp.pop 32.0
        %v597 = vmul.f32 %v595, %v596
        %v598 = vsub.f32 %v589, %v597
        %v599 = vmul.f32 %v598, %v598
        %v600 = vsel %vm592, %v599, 0.0
        %601 = vadd.xlane.f32.xlu0 %v600
        %v602 = vpop.xlane.xlu0 %601
        %v603 = vmul.f32 %v602, 0.032258064
        %v604 = vrsqrt.pop %v603
        %v605 = vmul.f32 %v603, %v604
        %vm606 = vcmp.eq.f32.partialorder %v603, inf
        %v607 = vsel %vm606, %v603, %v605
        %vm608 = vcmp.eq.f32.partialorder %v603, 0.0
        %v609 = vand.u32 %v603, 2147483648
        %v610 = vsel %vm608, %v609, %v607
        %v612 = vlaneseq
        %v613 = vshrl.u32 %v612, 7
        %v614 = vsub.s32 0, %v613
        %v615 = vrot.slane %v590, %v614
        %v617 = vmul.f32 %v615, %v598
        %v618 = vadd.f32 %v610, 1e-06
        %v619 = vrcp.pop %v618
        %v620 = vmul.f32 %v617, %v619
        %v622 = vlaneseq
        %v623 = vshrl.u32 %v622, 7
        %v624 = vsub.s32 0, %v623
        %v625 = vrot.slane %v591, %v624
        %v627 = vadd.f32 %v620, %v625
        %v628 = vpack.c.bf16 %v627, %v627
        %v629 = vld [vmem:[%s4] sm:$0xf]
        %v630 = vld [vmem:[%s4 + $0x4] sm:$0xf]
        %v631 = vld [vmem:[%s4 + $0x8] sm:$0xf]
        %v632 = vld [vmem:[%s4 + $0xc] sm:$0xf]
        %v633 = vld [vmem:[%s7] sm:$0x1]
        %v635 = vlaneseq
        %v636 = vshrl.u32 %v635, 7
        %v637 = vsub.s32 0, %v636
        %v638 = vrot.slane %v633, %v637
        %v644 = vunpack.c.l.b16 %v629
        %v645 = vunpack.c.l.b16 %v630
        %v646 = vunpack.c.l.b16 %v631
        %v647 = vunpack.c.l.b16 %v632
        %v648 = vpack.c.b16 %v645, %v644
        %v649 = vpack.c.b16 %v647, %v646
        %v653 = vsel %vm592, %v628, 0
        %655 = vmatprep.subr.bf16.mxu0 0
        %656 = vmatpush1.bf16.msra.mxu0 0
        %657 = vmatprep.subr.bf16.mxu0 0
        %658 = vmatpush1.bf16.msra.mxu0 0
        %659 = vmatprep.subr.bf16.mxu0 0
        %660 = vmatpush1.bf16.msra.mxu0 0
        %661 = vmatprep.subr.bf16.mxu0 0
        %662 = vmatpush1.bf16.msra.mxu0 0
        %663 = vmatprep.subr.bf16.mxu0 0
        %664 = vmatpush1.bf16.msra.mxu0 0
        %665 = vmatprep.subr.bf16.mxu0 0
        %666 = vmatpush1.bf16.msra.mxu0 0
        %667 = vmatprep.subr.bf16.mxu0 0
        %668 = vmatpush1.bf16.msra.mxu0 %v649
        %669 = vmatprep.subr.bf16.mxu0 0
        %670 = vmatpush1.bf16.msra.mxu0 %v648
        %671 = vmatprep.subr.bf16.mxu0 0
        %672 = vmatpush2.bf16.msra.mxu0 0
        %673 = vmatprep.subr.bf16.mxu0 0
        %674 = vmatpush2.bf16.msra.mxu0 0
        %675 = vmatprep.subr.bf16.mxu0 0
        %676 = vmatpush2.bf16.msra.mxu0 0
        %677 = vmatprep.subr.bf16.mxu0 0
        %678 = vmatpush2.bf16.msra.mxu0 0
        %679 = vmatprep.subr.bf16.mxu0 0
        %680 = vmatpush2.bf16.msra.mxu0 0
        %681 = vmatprep.subr.bf16.mxu0 0
        %682 = vmatpush2.bf16.msra.mxu0 0
        %683 = vmatprep.subr.bf16.mxu0 0
        %684 = vmatpush2.bf16.msra.mxu0 0
        %685 = vmatprep.subr.bf16.mxu0 0
        %686 = vmatpush2.bf16.msra.mxu0 0
        %687 = vmatprep.mubr.bf16.mxu0 0
        %688 = vmatmul.mubr.bf16.gmra.mxu0 %v653
        %v689 = vpop.f32.mrf.mxu0
        %v690 = vadd.f32 %v638, %v689
        %v691 = vpop.f32.mrf.mxu0
        %v692 = vpop.f32.mrf.mxu0
        %v693 = vpop.f32.mrf.mxu0
        %694 = vdwg.mxu0
        %v695 = vld [vmem:[%s5] sm:$0xf]
        %v696 = vld [vmem:[%s5 + $0x4] sm:$0xf]
        %v697 = vld [vmem:[%s5 + $0x8] sm:$0xf]
        %v698 = vld [vmem:[%s5 + $0xc] sm:$0xf]
        %v699 = vld [vmem:[%s8] sm:$0x1]
        %v701 = vlaneseq
        %v702 = vshrl.u32 %v701, 7
        %v703 = vsub.s32 0, %v702
        %v704 = vrot.slane %v699, %v703
        %v710 = vunpack.c.l.b16 %v695
        %v711 = vunpack.c.l.b16 %v696
        %v712 = vunpack.c.l.b16 %v697
        %v713 = vunpack.c.l.b16 %v698
        %v714 = vpack.c.b16 %v711, %v710
        %v715 = vpack.c.b16 %v713, %v712
        %718 = vmatprep.subr.bf16.mxu0 0
        %719 = vmatpush1.bf16.msra.mxu0 0
        %720 = vmatprep.subr.bf16.mxu0 0
        %721 = vmatpush1.bf16.msra.mxu0 0
        %722 = vmatprep.subr.bf16.mxu0 0
        %723 = vmatpush1.bf16.msra.mxu0 0
        %724 = vmatprep.subr.bf16.mxu0 0
        %725 = vmatpush1.bf16.msra.mxu0 0
        %726 = vmatprep.subr.bf16.mxu0 0
        %727 = vmatpush1.bf16.msra.mxu0 0
        %728 = vmatprep.subr.bf16.mxu0 0
        %729 = vmatpush1.bf16.msra.mxu0 0
        %730 = vmatprep.subr.bf16.mxu0 0
        %731 = vmatpush1.bf16.msra.mxu0 %v715
        %732 = vmatprep.subr.bf16.mxu0 0
        %733 = vmatpush1.bf16.msra.mxu0 %v714
        %734 = vmatprep.subr.bf16.mxu0 0
        %735 = vmatpush2.bf16.msra.mxu0 0
        %736 = vmatprep.subr.bf16.mxu0 0
        %737 = vmatpush2.bf16.msra.mxu0 0
        %738 = vmatprep.subr.bf16.mxu0 0
        %739 = vmatpush2.bf16.msra.mxu0 0
        %740 = vmatprep.subr.bf16.mxu0 0
        %741 = vmatpush2.bf16.msra.mxu0 0
        %742 = vmatprep.subr.bf16.mxu0 0
        %743 = vmatpush2.bf16.msra.mxu0 0
        %744 = vmatprep.subr.bf16.mxu0 0
        %745 = vmatpush2.bf16.msra.mxu0 0
        %746 = vmatprep.subr.bf16.mxu0 0
        %747 = vmatpush2.bf16.msra.mxu0 0
        %748 = vmatprep.subr.bf16.mxu0 0
        %749 = vmatpush2.bf16.msra.mxu0 0
        %750 = vmatprep.mubr.bf16.mxu0 0
        %751 = vmatmul.mubr.bf16.gmra.mxu0 %v653
        %v752 = vpop.f32.mrf.mxu0
        %v753 = vadd.f32 %v704, %v752
        %v754 = vpop.f32.mrf.mxu0
        %v755 = vpop.f32.mrf.mxu0
        %v756 = vpop.f32.mrf.mxu0
        %757 = vdwg.mxu0
        %v758 = vld [vmem:[%s6] sm:$0xf]
        %v759 = vld [vmem:[%s6 + $0x4] sm:$0xf]
        %v760 = vld [vmem:[%s6 + $0x8] sm:$0xf]
        %v761 = vld [vmem:[%s6 + $0xc] sm:$0xf]
        %v762 = vld [vmem:[%s9] sm:$0x1]
        %v764 = vlaneseq
        %v765 = vshrl.u32 %v764, 7
        %v766 = vsub.s32 0, %v765
        %v767 = vrot.slane %v762, %v766
        %v773 = vunpack.c.l.b16 %v758
        %v774 = vunpack.c.l.b16 %v759
        %v775 = vunpack.c.l.b16 %v760
        %v776 = vunpack.c.l.b16 %v761
        %v777 = vpack.c.b16 %v774, %v773
        %v778 = vpack.c.b16 %v776, %v775
        %781 = vmatprep.subr.bf16.mxu0 0
        %782 = vmatpush1.bf16.msra.mxu0 0
        %783 = vmatprep.subr.bf16.mxu0 0
        %784 = vmatpush1.bf16.msra.mxu0 0
        %785 = vmatprep.subr.bf16.mxu0 0
        %786 = vmatpush1.bf16.msra.mxu0 0
        %787 = vmatprep.subr.bf16.mxu0 0
        %788 = vmatpush1.bf16.msra.mxu0 0
        %789 = vmatprep.subr.bf16.mxu0 0
        %790 = vmatpush1.bf16.msra.mxu0 0
        %791 = vmatprep.subr.bf16.mxu0 0
        %792 = vmatpush1.bf16.msra.mxu0 0
        %793 = vmatprep.subr.bf16.mxu0 0
        %794 = vmatpush1.bf16.msra.mxu0 %v778
        %795 = vmatprep.subr.bf16.mxu0 0
        %796 = vmatpush1.bf16.msra.mxu0 %v777
        %797 = vmatprep.subr.bf16.mxu0 0
        %798 = vmatpush2.bf16.msra.mxu0 0
        %799 = vmatprep.subr.bf16.mxu0 0
        %800 = vmatpush2.bf16.msra.mxu0 0
        %801 = vmatprep.subr.bf16.mxu0 0
        %802 = vmatpush2.bf16.msra.mxu0 0
        %803 = vmatprep.subr.bf16.mxu0 0
        %804 = vmatpush2.bf16.msra.mxu0 0
        %805 = vmatprep.subr.bf16.mxu0 0
        %806 = vmatpush2.bf16.msra.mxu0 0
        %807 = vmatprep.subr.bf16.mxu0 0
        %808 = vmatpush2.bf16.msra.mxu0 0
        %809 = vmatprep.subr.bf16.mxu0 0
        %810 = vmatpush2.bf16.msra.mxu0 0
        %811 = vmatprep.subr.bf16.mxu0 0
        %812 = vmatpush2.bf16.msra.mxu0 0
        %813 = vmatprep.mubr.bf16.mxu0 0
        %814 = vmatmul.mubr.bf16.gmra.mxu0 %v653
        %v815 = vpop.f32.mrf.mxu0
        %v816 = vadd.f32 %v767, %v815
        %v817 = vpop.f32.mrf.mxu0
        %v818 = vpop.f32.mrf.mxu0
        %v819 = vpop.f32.mrf.mxu0
        %820 = vdwg.mxu0
        %v821 = vld [vmem:[%s587] sm:$0xff]
        %v823 = vsel %vm592, %v690, 0
        %v826 = vsel %vm592, %v753, 0
        %828 = vmatprep.subr.mxu0 0.0
        %829 = vmatpush1.xpose.msra.mxu0 0.0
        %830 = vmatprep.subr.mxu0 0.0
        %831 = vmatpush1.xpose.msra.mxu0 0.0
        %832 = vmatprep.subr.mxu0 0.0
        %833 = vmatpush1.xpose.msra.mxu0 0.0
        %834 = vmatprep.subr.mxu0 0.0
        %835 = vmatpush1.xpose.msra.mxu0 0.0
        %836 = vmatprep.subr.mxu0 0.0
        %837 = vmatpush1.xpose.msra.mxu0 0.0
        %838 = vmatprep.subr.mxu0 0.0
        %839 = vmatpush1.xpose.msra.mxu0 0.0
        %840 = vmatprep.subr.mxu0 0.0
        %841 = vmatpush1.xpose.msra.mxu0 0.0
        %842 = vmatprep.subr.mxu0 0.0
        %843 = vmatpush1.xpose.msra.mxu0 0.0
        %844 = vmatprep.subr.mxu0 0.0
        %845 = vmatpush1.xpose.msra.mxu0 0.0
        %846 = vmatprep.subr.mxu0 0.0
        %847 = vmatpush1.xpose.msra.mxu0 0.0
        %848 = vmatprep.subr.mxu0 0.0
        %849 = vmatpush1.xpose.msra.mxu0 0.0
        %850 = vmatprep.subr.mxu0 0.0
        %851 = vmatpush1.xpose.msra.mxu0 0.0
        %852 = vmatprep.subr.mxu0 0.0
        %853 = vmatpush1.xpose.msra.mxu0 0.0
        %854 = vmatprep.subr.mxu0 0.0
        %855 = vmatpush1.xpose.msra.mxu0 0.0
        %856 = vmatprep.subr.mxu0 0.0
        %857 = vmatpush1.xpose.msra.mxu0 0.0
        %858 = vmatprep.subr.mxu0 0.0
        %859 = vmatpush1.xpose.msra.mxu0 %v826
        %860 = vmatprep.subr.mxu0 0.0
        %861 = vmatpush2.xpose.msra.mxu0 0.0
        %862 = vmatprep.subr.mxu0 0.0
        %863 = vmatpush2.xpose.msra.mxu0 0.0
        %864 = vmatprep.subr.mxu0 0.0
        %865 = vmatpush2.xpose.msra.mxu0 0.0
        %866 = vmatprep.subr.mxu0 0.0
        %867 = vmatpush2.xpose.msra.mxu0 0.0
        %868 = vmatprep.subr.mxu0 0.0
        %869 = vmatpush2.xpose.msra.mxu0 0.0
        %870 = vmatprep.subr.mxu0 0.0
        %871 = vmatpush2.xpose.msra.mxu0 0.0
        %872 = vmatprep.subr.mxu0 0.0
        %873 = vmatpush2.xpose.msra.mxu0 0.0
        %874 = vmatprep.subr.mxu0 0.0
        %875 = vmatpush2.xpose.msra.mxu0 0.0
        %876 = vmatprep.subr.mxu0 0.0
        %877 = vmatpush2.xpose.msra.mxu0 0.0
        %878 = vmatprep.subr.mxu0 0.0
        %879 = vmatpush2.xpose.msra.mxu0 0.0
        %880 = vmatprep.subr.mxu0 0.0
        %881 = vmatpush2.xpose.msra.mxu0 0.0
        %882 = vmatprep.subr.mxu0 0.0
        %883 = vmatpush2.xpose.msra.mxu0 0.0
        %884 = vmatprep.subr.mxu0 0.0
        %885 = vmatpush2.xpose.msra.mxu0 0.0
        %886 = vmatprep.subr.mxu0 0.0
        %887 = vmatpush2.xpose.msra.mxu0 0.0
        %888 = vmatprep.subr.mxu0 0.0
        %889 = vmatpush2.xpose.msra.mxu0 0.0
        %890 = vmatprep.subr.mxu0 0.0
        %891 = vmatpush2.xpose.msra.mxu0 0.0
        %892 = vmatprep.mubr.f32.mxu0 0.0
        %893 = vmatmul.mubr.f32.gmra.mxu0 %v823
        %v894 = vpop.f32.mrf.mxu0
        %v895 = vadd.f32 %v821, %v894
        %v896 = vpop.f32.mrf.mxu0
        %897 = vdwg.mxu0
        %vm898 = vcmask 64512
        %v899 = vsel %vm898, %v895, -inf
        %900 = vmax.xlane.f32.xlu0 %v899
        %v901 = vpop.xlane.xlu0 %900
        %v902 = vsub.f32 %v895, %v901
        %v903 = vmul.f32 %v902, 1.442695
        %v904 = vpow.pop %v903
        %v905 = vsel %vm898, %v904, 0.0
        %906 = vadd.xlane.f32.xlu0 %v905
        %v907 = vpop.xlane.xlu0 %906
        %v908 = vrcp.pop %v907
        %v909 = vmul.f32 %v904, %v908
        %v911 = vsel %vm898, %v909, 0
        %913 = vmatprep.subr.mxu0 0.0
        %914 = vmatpush1.msra.mxu0 0.0
        %915 = vmatprep.subr.mxu0 0.0
        %916 = vmatpush1.msra.mxu0 0.0
        %917 = vmatprep.subr.mxu0 0.0
        %918 = vmatpush1.msra.mxu0 0.0
        %919 = vmatprep.subr.mxu0 0.0
        %920 = vmatpush1.msra.mxu0 0.0
        %921 = vmatprep.subr.mxu0 0.0
        %922 = vmatpush1.msra.mxu0 0.0
        %923 = vmatprep.subr.mxu0 0.0
        %924 = vmatpush1.msra.mxu0 0.0
        %925 = vmatprep.subr.mxu0 0.0
        %926 = vmatpush1.msra.mxu0 0.0
        %927 = vmatprep.subr.mxu0 0.0
        %928 = vmatpush1.msra.mxu0 0.0
        %929 = vmatprep.subr.mxu0 0.0
        %930 = vmatpush1.msra.mxu0 0.0
        %931 = vmatprep.subr.mxu0 0.0
        %932 = vmatpush1.msra.mxu0 0.0
        %933 = vmatprep.subr.mxu0 0.0
        %934 = vmatpush1.msra.mxu0 0.0
        %935 = vmatprep.subr.mxu0 0.0
        %936 = vmatpush1.msra.mxu0 0.0
        %937 = vmatprep.subr.mxu0 0.0
        %938 = vmatpush1.msra.mxu0 0.0
        %939 = vmatprep.subr.mxu0 0.0
        %940 = vmatpush1.msra.mxu0 0.0
        %941 = vmatprep.subr.mxu0 0.0
        %942 = vmatpush1.msra.mxu0 0.0
        %943 = vmatprep.subr.mxu0 0.0
        %944 = vmatpush1.msra.mxu0 %v816
        %945 = vmatprep.subr.mxu0 0.0
        %946 = vmatpush2.msra.mxu0 0.0
        %947 = vmatprep.subr.mxu0 0.0
        %948 = vmatpush2.msra.mxu0 0.0
        %949 = vmatprep.subr.mxu0 0.0
        %950 = vmatpush2.msra.mxu0 0.0
        %951 = vmatprep.subr.mxu0 0.0
        %952 = vmatpush2.msra.mxu0 0.0
        %953 = vmatprep.subr.mxu0 0.0
        %954 = vmatpush2.msra.mxu0 0.0
        %955 = vmatprep.subr.mxu0 0.0
        %956 = vmatpush2.msra.mxu0 0.0
        %957 = vmatprep.subr.mxu0 0.0
        %958 = vmatpush2.msra.mxu0 0.0
        %959 = vmatprep.subr.mxu0 0.0
        %960 = vmatpush2.msra.mxu0 0.0
        %961 = vmatprep.subr.mxu0 0.0
        %962 = vmatpush2.msra.mxu0 0.0
        %963 = vmatprep.subr.mxu0 0.0
        %964 = vmatpush2.msra.mxu0 0.0
        %965 = vmatprep.subr.mxu0 0.0
        %966 = vmatpush2.msra.mxu0 0.0
        %967 = vmatprep.subr.mxu0 0.0
        %968 = vmatpush2.msra.mxu0 0.0
        %969 = vmatprep.subr.mxu0 0.0
        %970 = vmatpush2.msra.mxu0 0.0
        %971 = vmatprep.subr.mxu0 0.0
        %972 = vmatpush2.msra.mxu0 0.0
        %973 = vmatprep.subr.mxu0 0.0
        %974 = vmatpush2.msra.mxu0 0.0
        %975 = vmatprep.subr.mxu0 0.0
        %976 = vmatpush2.msra.mxu0 0.0
        %977 = vmatprep.mubr.f32.mxu0 0.0
        %978 = vmatmul.mubr.f32.gmra.mxu0 %v911
        %v979 = vpop.f32.mrf.mxu0
        %v980 = vadd.f32 0.0, %v979
        %v981 = vpop.f32.mrf.mxu0
        %982 = vdwg.mxu0
        %v983 = vpack.c.bf16 %v980, %v980
        %v984 = vld [vmem:[%s10] sm:$0xf]
        %v985 = vld [vmem:[%s10 + $0x4] sm:$0xf]
        %v986 = vld [vmem:[%s10 + $0x8] sm:$0xf]
        %v987 = vld [vmem:[%s10 + $0xc] sm:$0xf]
        %988 = vrot.lane.b32.xlu0 %v690, 96
        %v989 = vpop.permute.xlu0 %988
        %990 = vrot.lane.b32.xlu0 %v753, 96
        %v991 = vpop.permute.xlu0 %990
        %v992 = vsel %vm592, %v989, 0
        %v994 = vsel %vm592, %v991, 0
        %996 = vmatprep.subr.mxu0 0.0
        %997 = vmatpush1.xpose.msra.mxu0 0.0
        %998 = vmatprep.subr.mxu0 0.0
        %999 = vmatpush1.xpose.msra.mxu0 0.0
        %1000 = vmatprep.subr.mxu0 0.0
        %1001 = vmatpush1.xpose.msra.mxu0 0.0
        %1002 = vmatprep.subr.mxu0 0.0
        %1003 = vmatpush1.xpose.msra.mxu0 0.0
        %1004 = vmatprep.subr.mxu0 0.0
        %1005 = vmatpush1.xpose.msra.mxu0 0.0
        %1006 = vmatprep.subr.mxu0 0.0
        %1007 = vmatpush1.xpose.msra.mxu0 0.0
        %1008 = vmatprep.subr.mxu0 0.0
        %1009 = vmatpush1.xpose.msra.mxu0 0.0
        %1010 = vmatprep.subr.mxu0 0.0
        %1011 = vmatpush1.xpose.msra.mxu0 0.0
        %1012 = vmatprep.subr.mxu0 0.0
        %1013 = vmatpush1.xpose.msra.mxu0 0.0
        %1014 = vmatprep.subr.mxu0 0.0
        %1015 = vmatpush1.xpose.msra.mxu0 0.0
        %1016 = vmatprep.subr.mxu0 0.0
        %1017 = vmatpush1.xpose.msra.mxu0 0.0
        %1018 = vmatprep.subr.mxu0 0.0
        %1019 = vmatpush1.xpose.msra.mxu0 0.0
        %1020 = vmatprep.subr.mxu0 0.0
        %1021 = vmatpush1.xpose.msra.mxu0 0.0
        %1022 = vmatprep.subr.mxu0 0.0
        %1023 = vmatpush1.xpose.msra.mxu0 0.0
        %1024 = vmatprep.subr.mxu0 0.0
        %1025 = vmatpush1.xpose.msra.mxu0 0.0
        %1026 = vmatprep.subr.mxu0 0.0
        %1027 = vmatpush1.xpose.msra.mxu0 %v994
        %1028 = vmatprep.subr.mxu0 0.0
        %1029 = vmatpush2.xpose.msra.mxu0 0.0
        %1030 = vmatprep.subr.mxu0 0.0
        %1031 = vmatpush2.xpose.msra.mxu0 0.0
        %1032 = vmatprep.subr.mxu0 0.0
        %1033 = vmatpush2.xpose.msra.mxu0 0.0
        %1034 = vmatprep.subr.mxu0 0.0
        %1035 = vmatpush2.xpose.msra.mxu0 0.0
        %1036 = vmatprep.subr.mxu0 0.0
        %1037 = vmatpush2.xpose.msra.mxu0 0.0
        %1038 = vmatprep.subr.mxu0 0.0
        %1039 = vmatpush2.xpose.msra.mxu0 0.0
        %1040 = vmatprep.subr.mxu0 0.0
        %1041 = vmatpush2.xpose.msra.mxu0 0.0
        %1042 = vmatprep.subr.mxu0 0.0
        %1043 = vmatpush2.xpose.msra.mxu0 0.0
        %1044 = vmatprep.subr.mxu0 0.0
        %1045 = vmatpush2.xpose.msra.mxu0 0.0
        %1046 = vmatprep.subr.mxu0 0.0
        %1047 = vmatpush2.xpose.msra.mxu0 0.0
        %1048 = vmatprep.subr.mxu0 0.0
        %1049 = vmatpush2.xpose.msra.mxu0 0.0
        %1050 = vmatprep.subr.mxu0 0.0
        %1051 = vmatpush2.xpose.msra.mxu0 0.0
        %1052 = vmatprep.subr.mxu0 0.0
        %1053 = vmatpush2.xpose.msra.mxu0 0.0
        %1054 = vmatprep.subr.mxu0 0.0
        %1055 = vmatpush2.xpose.msra.mxu0 0.0
        %1056 = vmatprep.subr.mxu0 0.0
        %1057 = vmatpush2.xpose.msra.mxu0 0.0
        %1058 = vmatprep.subr.mxu0 0.0
        %1059 = vmatpush2.xpose.msra.mxu0 0.0
        %1060 = vmatprep.mubr.f32.mxu0 0.0
        %1061 = vmatmul.mubr.f32.gmra.mxu0 %v992
        %v1062 = vpop.f32.mrf.mxu0
        %v1063 = vadd.f32 %v821, %v1062
        %v1064 = vpop.f32.mrf.mxu0
        %1065 = vdwg.mxu0
        %v1066 = vsel %vm898, %v1063, -inf
        %1067 = vmax.xlane.f32.xlu0 %v1066
        %v1068 = vpop.xlane.xlu0 %1067
        %v1069 = vsub.f32 %v1063, %v1068
        %v1070 = vmul.f32 %v1069, 1.442695
        %v1071 = vpow.pop %v1070
        %v1072 = vsel %vm898, %v1071, 0.0
        %1073 = vadd.xlane.f32.xlu0 %v1072
        %v1074 = vpop.xlane.xlu0 %1073
        %v1075 = vrcp.pop %v1074
        %v1076 = vmul.f32 %v1071, %v1075
        %1078 = vrot.lane.b32.xlu0 %v816, 96
        %v1079 = vpop.permute.xlu0 %1078
        %v1082 = vsel %vm898, %v1076, 0
        %1084 = vmatprep.subr.mxu0 0.0
        %1085 = vmatpush1.msra.mxu0 0.0
        %1086 = vmatprep.subr.mxu0 0.0
        %1087 = vmatpush1.msra.mxu0 0.0
        %1088 = vmatprep.subr.mxu0 0.0
        %1089 = vmatpush1.msra.mxu0 0.0
        %1090 = vmatprep.subr.mxu0 0.0
        %1091 = vmatpush1.msra.mxu0 0.0
        %1092 = vmatprep.subr.mxu0 0.0
        %1093 = vmatpush1.msra.mxu0 0.0
        %1094 = vmatprep.subr.mxu0 0.0
        %1095 = vmatpush1.msra.mxu0 0.0
        %1096 = vmatprep.subr.mxu0 0.0
        %1097 = vmatpush1.msra.mxu0 0.0
        %1098 = vmatprep.subr.mxu0 0.0
        %1099 = vmatpush1.msra.mxu0 0.0
        %1100 = vmatprep.subr.mxu0 0.0
        %1101 = vmatpush1.msra.mxu0 0.0
        %1102 = vmatprep.subr.mxu0 0.0
        %1103 = vmatpush1.msra.mxu0 0.0
        %1104 = vmatprep.subr.mxu0 0.0
        %1105 = vmatpush1.msra.mxu0 0.0
        %1106 = vmatprep.subr.mxu0 0.0
        %1107 = vmatpush1.msra.mxu0 0.0
        %1108 = vmatprep.subr.mxu0 0.0
        %1109 = vmatpush1.msra.mxu0 0.0
        %1110 = vmatprep.subr.mxu0 0.0
        %1111 = vmatpush1.msra.mxu0 0.0
        %1112 = vmatprep.subr.mxu0 0.0
        %1113 = vmatpush1.msra.mxu0 0.0
        %1114 = vmatprep.subr.mxu0 0.0
        %1115 = vmatpush1.msra.mxu0 %v1079
        %1116 = vmatprep.subr.mxu0 0.0
        %1117 = vmatpush2.msra.mxu0 0.0
        %1118 = vmatprep.subr.mxu0 0.0
        %1119 = vmatpush2.msra.mxu0 0.0
        %1120 = vmatprep.subr.mxu0 0.0
        %1121 = vmatpush2.msra.mxu0 0.0
        %1122 = vmatprep.subr.mxu0 0.0
        %1123 = vmatpush2.msra.mxu0 0.0
        %1124 = vmatprep.subr.mxu0 0.0
        %1125 = vmatpush2.msra.mxu0 0.0
        %1126 = vmatprep.subr.mxu0 0.0
        %1127 = vmatpush2.msra.mxu0 0.0
        %1128 = vmatprep.subr.mxu0 0.0
        %1129 = vmatpush2.msra.mxu0 0.0
        %1130 = vmatprep.subr.mxu0 0.0
        %1131 = vmatpush2.msra.mxu0 0.0
        %1132 = vmatprep.subr.mxu0 0.0
        %1133 = vmatpush2.msra.mxu0 0.0
        %1134 = vmatprep.subr.mxu0 0.0
        %1135 = vmatpush2.msra.mxu0 0.0
        %1136 = vmatprep.subr.mxu0 0.0
        %1137 = vmatpush2.msra.mxu0 0.0
        %1138 = vmatprep.subr.mxu0 0.0
        %1139 = vmatpush2.msra.mxu0 0.0
        %1140 = vmatprep.subr.mxu0 0.0
        %1141 = vmatpush2.msra.mxu0 0.0
        %1142 = vmatprep.subr.mxu0 0.0
        %1143 = vmatpush2.msra.mxu0 0.0
        %1144 = vmatprep.subr.mxu0 0.0
        %1145 = vmatpush2.msra.mxu0 0.0
        %1146 = vmatprep.subr.mxu0 0.0
        %1147 = vmatpush2.msra.mxu0 0.0
        %1148 = vmatprep.mubr.f32.mxu0 0.0
        %1149 = vmatmul.mubr.f32.gmra.mxu0 %v1082
        %v1150 = vpop.f32.mrf.mxu0
        %v1151 = vadd.f32 0.0, %v1150
        %v1152 = vpop.f32.mrf.mxu0
        %1153 = vdwg.mxu0
        %v1154 = vpack.c.bf16 %v1151, %v1151
        %v1155 = vld [vmem:[%s10 + $0x10] sm:$0xf]
        %v1156 = vld [vmem:[%s10 + $0x14] sm:$0xf]
        %v1157 = vld [vmem:[%s10 + $0x18] sm:$0xf]
        %v1158 = vld [vmem:[%s10 + $0x1c] sm:$0xf]
        %v1163 = vunpack.c.l.b16 %v1155
        %v1164 = vunpack.c.l.b16 %v1156
        %v1165 = vunpack.c.l.b16 %v1157
        %v1166 = vunpack.c.l.b16 %v1158
        %v1167 = vpack.c.b16 %v1164, %v1163
        %v1168 = vpack.c.b16 %v1166, %v1165
        %v1172 = vsel %vm592, %v1154, 0
        %1174 = vmatprep.subr.bf16.mxu0 0
        %1175 = vmatpush1.bf16.msra.mxu0 0
        %1176 = vmatprep.subr.bf16.mxu0 0
        %1177 = vmatpush1.bf16.msra.mxu0 0
        %1178 = vmatprep.subr.bf16.mxu0 0
        %1179 = vmatpush1.bf16.msra.mxu0 0
        %1180 = vmatprep.subr.bf16.mxu0 0
        %1181 = vmatpush1.bf16.msra.mxu0 0
        %1182 = vmatprep.subr.bf16.mxu0 0
        %1183 = vmatpush1.bf16.msra.mxu0 0
        %1184 = vmatprep.subr.bf16.mxu0 0
        %1185 = vmatpush1.bf16.msra.mxu0 0
        %1186 = vmatprep.subr.bf16.mxu0 0
        %1187 = vmatpush1.bf16.msra.mxu0 %v1168
        %1188 = vmatprep.subr.bf16.mxu0 0
        %1189 = vmatpush1.bf16.msra.mxu0 %v1167
        %1190 = vmatprep.subr.bf16.mxu0 0
        %1191 = vmatpush2.bf16.msra.mxu0 0
        %1192 = vmatprep.subr.bf16.mxu0 0
        %1193 = vmatpush2.bf16.msra.mxu0 0
        %1194 = vmatprep.subr.bf16.mxu0 0
        %1195 = vmatpush2.bf16.msra.mxu0 0
        %1196 = vmatprep.subr.bf16.mxu0 0
        %1197 = vmatpush2.bf16.msra.mxu0 0
        %1198 = vmatprep.subr.bf16.mxu0 0
        %1199 = vmatpush2.bf16.msra.mxu0 0
        %1200 = vmatprep.subr.bf16.mxu0 0
        %1201 = vmatpush2.bf16.msra.mxu0 0
        %1202 = vmatprep.subr.bf16.mxu0 0
        %1203 = vmatpush2.bf16.msra.mxu0 0
        %1204 = vmatprep.subr.bf16.mxu0 0
        %1205 = vmatpush2.bf16.msra.mxu0 0
        %1206 = vmatprep.mubr.bf16.mxu0 0
        %1207 = vmatmul.mubr.bf16.gmra.mxu0 %v1172
        %v1208 = vpop.f32.mrf.mxu0
        %v1209 = vadd.f32 0.0, %v1208
        %v1210 = vpop.f32.mrf.mxu0
        %v1211 = vpop.f32.mrf.mxu0
        %v1212 = vpop.f32.mrf.mxu0
        %1213 = vdwg.mxu0
        %v1218 = vunpack.c.l.b16 %v984
        %v1219 = vunpack.c.l.b16 %v985
        %v1220 = vunpack.c.l.b16 %v986
        %v1221 = vunpack.c.l.b16 %v987
        %v1222 = vpack.c.b16 %v1219, %v1218
        %v1223 = vpack.c.b16 %v1221, %v1220
        %v1227 = vsel %vm592, %v983, 0
        %1229 = vmatprep.subr.bf16.mxu0 0
        %1230 = vmatpush1.bf16.msra.mxu0 0
        %1231 = vmatprep.subr.bf16.mxu0 0
        %1232 = vmatpush1.bf16.msra.mxu0 0
        %1233 = vmatprep.subr.bf16.mxu0 0
        %1234 = vmatpush1.bf16.msra.mxu0 0
        %1235 = vmatprep.subr.bf16.mxu0 0
        %1236 = vmatpush1.bf16.msra.mxu0 0
        %1237 = vmatprep.subr.bf16.mxu0 0
        %1238 = vmatpush1.bf16.msra.mxu0 0
        %1239 = vmatprep.subr.bf16.mxu0 0
        %1240 = vmatpush1.bf16.msra.mxu0 0
        %1241 = vmatprep.subr.bf16.mxu0 0
        %1242 = vmatpush1.bf16.msra.mxu0 %v1223
        %1243 = vmatprep.subr.bf16.mxu0 0
        %1244 = vmatpush1.bf16.msra.mxu0 %v1222
        %1245 = vmatprep.subr.bf16.mxu0 0
        %1246 = vmatpush2.bf16.msra.mxu0 0
        %1247 = vmatprep.subr.bf16.mxu0 0
        %1248 = vmatpush2.bf16.msra.mxu0 0
        %1249 = vmatprep.subr.bf16.mxu0 0
        %1250 = vmatpush2.bf16.msra.mxu0 0
        %1251 = vmatprep.subr.bf16.mxu0 0
        %1252 = vmatpush2.bf16.msra.mxu0 0
        %1253 = vmatprep.subr.bf16.mxu0 0
        %1254 = vmatpush2.bf16.msra.mxu0 0
        %1255 = vmatprep.subr.bf16.mxu0 0
        %1256 = vmatpush2.bf16.msra.mxu0 0
        %1257 = vmatprep.subr.bf16.mxu0 0
        %1258 = vmatpush2.bf16.msra.mxu0 0
        %1259 = vmatprep.subr.bf16.mxu0 0
        %1260 = vmatpush2.bf16.msra.mxu0 0
        %1261 = vmatprep.mubr.bf16.mxu0 0
        %1262 = vmatmul.mubr.bf16.gmra.mxu0 %v1227
        %v1263 = vpop.f32.mrf.mxu0
        %v1264 = vadd.f32 %v1209, %v1263
        %v1265 = vpop.f32.mrf.mxu0
        %v1266 = vpop.f32.mrf.mxu0
        %v1267 = vpop.f32.mrf.mxu0
        %1268 = vdwg.mxu0
        %1269 = vrot.lane.b32.xlu0 %v690, 64
        %v1270 = vpop.permute.xlu0 %1269
        %1271 = vrot.lane.b32.xlu0 %v753, 64
        %v1272 = vpop.permute.xlu0 %1271
        %v1273 = vsel %vm592, %v1270, 0
        %v1275 = vsel %vm592, %v1272, 0
        %1277 = vmatprep.subr.mxu0 0.0
        %1278 = vmatpush1.xpose.msra.mxu0 0.0
        %1279 = vmatprep.subr.mxu0 0.0
        %1280 = vmatpush1.xpose.msra.mxu0 0.0
        %1281 = vmatprep.subr.mxu0 0.0
        %1282 = vmatpush1.xpose.msra.mxu0 0.0
        %1283 = vmatprep.subr.mxu0 0.0
        %1284 = vmatpush1.xpose.msra.mxu0 0.0
        %1285 = vmatprep.subr.mxu0 0.0
        %1286 = vmatpush1.xpose.msra.mxu0 0.0
        %1287 = vmatprep.subr.mxu0 0.0
        %1288 = vmatpush1.xpose.msra.mxu0 0.0
        %1289 = vmatprep.subr.mxu0 0.0
        %1290 = vmatpush1.xpose.msra.mxu0 0.0
        %1291 = vmatprep.subr.mxu0 0.0
        %1292 = vmatpush1.xpose.msra.mxu0 0.0
        %1293 = vmatprep.subr.mxu0 0.0
        %1294 = vmatpush1.xpose.msra.mxu0 0.0
        %1295 = vmatprep.subr.mxu0 0.0
        %1296 = vmatpush1.xpose.msra.mxu0 0.0
        %1297 = vmatprep.subr.mxu0 0.0
        %1298 = vmatpush1.xpose.msra.mxu0 0.0
        %1299 = vmatprep.subr.mxu0 0.0
        %1300 = vmatpush1.xpose.msra.mxu0 0.0
        %1301 = vmatprep.subr.mxu0 0.0
        %1302 = vmatpush1.xpose.msra.mxu0 0.0
        %1303 = vmatprep.subr.mxu0 0.0
        %1304 = vmatpush1.xpose.msra.mxu0 0.0
        %1305 = vmatprep.subr.mxu0 0.0
        %1306 = vmatpush1.xpose.msra.mxu0 0.0
        %1307 = vmatprep.subr.mxu0 0.0
        %1308 = vmatpush1.xpose.msra.mxu0 %v1275
        %1309 = vmatprep.subr.mxu0 0.0
        %1310 = vmatpush2.xpose.msra.mxu0 0.0
        %1311 = vmatprep.subr.mxu0 0.0
        %1312 = vmatpush2.xpose.msra.mxu0 0.0
        %1313 = vmatprep.subr.mxu0 0.0
        %1314 = vmatpush2.xpose.msra.mxu0 0.0
        %1315 = vmatprep.subr.mxu0 0.0
        %1316 = vmatpush2.xpose.msra.mxu0 0.0
        %1317 = vmatprep.subr.mxu0 0.0
        %1318 = vmatpush2.xpose.msra.mxu0 0.0
        %1319 = vmatprep.subr.mxu0 0.0
        %1320 = vmatpush2.xpose.msra.mxu0 0.0
        %1321 = vmatprep.subr.mxu0 0.0
        %1322 = vmatpush2.xpose.msra.mxu0 0.0
        %1323 = vmatprep.subr.mxu0 0.0
        %1324 = vmatpush2.xpose.msra.mxu0 0.0
        %1325 = vmatprep.subr.mxu0 0.0
        %1326 = vmatpush2.xpose.msra.mxu0 0.0
        %1327 = vmatprep.subr.mxu0 0.0
        %1328 = vmatpush2.xpose.msra.mxu0 0.0
        %1329 = vmatprep.subr.mxu0 0.0
        %1330 = vmatpush2.xpose.msra.mxu0 0.0
        %1331 = vmatprep.subr.mxu0 0.0
        %1332 = vmatpush2.xpose.msra.mxu0 0.0
        %1333 = vmatprep.subr.mxu0 0.0
        %1334 = vmatpush2.xpose.msra.mxu0 0.0
        %1335 = vmatprep.subr.mxu0 0.0
        %1336 = vmatpush2.xpose.msra.mxu0 0.0
        %1337 = vmatprep.subr.mxu0 0.0
        %1338 = vmatpush2.xpose.msra.mxu0 0.0
        %1339 = vmatprep.subr.mxu0 0.0
        %1340 = vmatpush2.xpose.msra.mxu0 0.0
        %1341 = vmatprep.mubr.f32.mxu0 0.0
        %1342 = vmatmul.mubr.f32.gmra.mxu0 %v1273
        %v1343 = vpop.f32.mrf.mxu0
        %v1344 = vadd.f32 %v821, %v1343
        %v1345 = vpop.f32.mrf.mxu0
        %1346 = vdwg.mxu0
        %v1347 = vsel %vm898, %v1344, -inf
        %1348 = vmax.xlane.f32.xlu0 %v1347
        %v1349 = vpop.xlane.xlu0 %1348
        %v1350 = vsub.f32 %v1344, %v1349
        %v1351 = vmul.f32 %v1350, 1.442695
        %v1352 = vpow.pop %v1351
        %v1353 = vsel %vm898, %v1352, 0.0
        %1354 = vadd.xlane.f32.xlu0 %v1353
        %v1355 = vpop.xlane.xlu0 %1354
        %v1356 = vrcp.pop %v1355
        %v1357 = vmul.f32 %v1352, %v1356
        %1358 = vrot.lane.b32.xlu0 %v816, 64
        %v1359 = vpop.permute.xlu0 %1358
        %v1362 = vsel %vm898, %v1357, 0
        %1364 = vmatprep.subr.mxu0 0.0
        %1365 = vmatpush1.msra.mxu0 0.0
        %1366 = vmatprep.subr.mxu0 0.0
        %1367 = vmatpush1.msra.mxu0 0.0
        %1368 = vmatprep.subr.mxu0 0.0
        %1369 = vmatpush1.msra.mxu0 0.0
        %1370 = vmatprep.subr.mxu0 0.0
        %1371 = vmatpush1.msra.mxu0 0.0
        %1372 = vmatprep.subr.mxu0 0.0
        %1373 = vmatpush1.msra.mxu0 0.0
        %1374 = vmatprep.subr.mxu0 0.0
        %1375 = vmatpush1.msra.mxu0 0.0
        %1376 = vmatprep.subr.mxu0 0.0
        %1377 = vmatpush1.msra.mxu0 0.0
        %1378 = vmatprep.subr.mxu0 0.0
        %1379 = vmatpush1.msra.mxu0 0.0
        %1380 = vmatprep.subr.mxu0 0.0
        %1381 = vmatpush1.msra.mxu0 0.0
        %1382 = vmatprep.subr.mxu0 0.0
        %1383 = vmatpush1.msra.mxu0 0.0
        %1384 = vmatprep.subr.mxu0 0.0
        %1385 = vmatpush1.msra.mxu0 0.0
        %1386 = vmatprep.subr.mxu0 0.0
        %1387 = vmatpush1.msra.mxu0 0.0
        %1388 = vmatprep.subr.mxu0 0.0
        %1389 = vmatpush1.msra.mxu0 0.0
        %1390 = vmatprep.subr.mxu0 0.0
        %1391 = vmatpush1.msra.mxu0 0.0
        %1392 = vmatprep.subr.mxu0 0.0
        %1393 = vmatpush1.msra.mxu0 0.0
        %1394 = vmatprep.subr.mxu0 0.0
        %1395 = vmatpush1.msra.mxu0 %v1359
        %1396 = vmatprep.subr.mxu0 0.0
        %1397 = vmatpush2.msra.mxu0 0.0
        %1398 = vmatprep.subr.mxu0 0.0
        %1399 = vmatpush2.msra.mxu0 0.0
        %1400 = vmatprep.subr.mxu0 0.0
        %1401 = vmatpush2.msra.mxu0 0.0
        %1402 = vmatprep.subr.mxu0 0.0
        %1403 = vmatpush2.msra.mxu0 0.0
        %1404 = vmatprep.subr.mxu0 0.0
        %1405 = vmatpush2.msra.mxu0 0.0
        %1406 = vmatprep.subr.mxu0 0.0
        %1407 = vmatpush2.msra.mxu0 0.0
        %1408 = vmatprep.subr.mxu0 0.0
        %1409 = vmatpush2.msra.mxu0 0.0
        %1410 = vmatprep.subr.mxu0 0.0
        %1411 = vmatpush2.msra.mxu0 0.0
        %1412 = vmatprep.subr.mxu0 0.0
        %1413 = vmatpush2.msra.mxu0 0.0
        %1414 = vmatprep.subr.mxu0 0.0
        %1415 = vmatpush2.msra.mxu0 0.0
        %1416 = vmatprep.subr.mxu0 0.0
        %1417 = vmatpush2.msra.mxu0 0.0
        %1418 = vmatprep.subr.mxu0 0.0
        %1419 = vmatpush2.msra.mxu0 0.0
        %1420 = vmatprep.subr.mxu0 0.0
        %1421 = vmatpush2.msra.mxu0 0.0
        %1422 = vmatprep.subr.mxu0 0.0
        %1423 = vmatpush2.msra.mxu0 0.0
        %1424 = vmatprep.subr.mxu0 0.0
        %1425 = vmatpush2.msra.mxu0 0.0
        %1426 = vmatprep.subr.mxu0 0.0
        %1427 = vmatpush2.msra.mxu0 0.0
        %1428 = vmatprep.mubr.f32.mxu0 0.0
        %1429 = vmatmul.mubr.f32.gmra.mxu0 %v1362
        %v1430 = vpop.f32.mrf.mxu0
        %v1431 = vadd.f32 0.0, %v1430
        %v1432 = vpop.f32.mrf.mxu0
        %1433 = vdwg.mxu0
        %v1434 = vpack.c.bf16 %v1431, %v1431
        %v1435 = vld [vmem:[%s10 + $0x20] sm:$0xf]
        %v1436 = vld [vmem:[%s10 + $0x24] sm:$0xf]
        %v1437 = vld [vmem:[%s10 + $0x28] sm:$0xf]
        %v1438 = vld [vmem:[%s10 + $0x2c] sm:$0xf]
        %v1443 = vunpack.c.l.b16 %v1435
        %v1444 = vunpack.c.l.b16 %v1436
        %v1445 = vunpack.c.l.b16 %v1437
        %v1446 = vunpack.c.l.b16 %v1438
        %v1447 = vpack.c.b16 %v1444, %v1443
        %v1448 = vpack.c.b16 %v1446, %v1445
        %v1452 = vsel %vm592, %v1434, 0
        %1454 = vmatprep.subr.bf16.mxu0 0
        %1455 = vmatpush1.bf16.msra.mxu0 0
        %1456 = vmatprep.subr.bf16.mxu0 0
        %1457 = vmatpush1.bf16.msra.mxu0 0
        %1458 = vmatprep.subr.bf16.mxu0 0
        %1459 = vmatpush1.bf16.msra.mxu0 0
        %1460 = vmatprep.subr.bf16.mxu0 0
        %1461 = vmatpush1.bf16.msra.mxu0 0
        %1462 = vmatprep.subr.bf16.mxu0 0
        %1463 = vmatpush1.bf16.msra.mxu0 0
        %1464 = vmatprep.subr.bf16.mxu0 0
        %1465 = vmatpush1.bf16.msra.mxu0 0
        %1466 = vmatprep.subr.bf16.mxu0 0
        %1467 = vmatpush1.bf16.msra.mxu0 %v1448
        %1468 = vmatprep.subr.bf16.mxu0 0
        %1469 = vmatpush1.bf16.msra.mxu0 %v1447
        %1470 = vmatprep.subr.bf16.mxu0 0
        %1471 = vmatpush2.bf16.msra.mxu0 0
        %1472 = vmatprep.subr.bf16.mxu0 0
        %1473 = vmatpush2.bf16.msra.mxu0 0
        %1474 = vmatprep.subr.bf16.mxu0 0
        %1475 = vmatpush2.bf16.msra.mxu0 0
        %1476 = vmatprep.subr.bf16.mxu0 0
        %1477 = vmatpush2.bf16.msra.mxu0 0
        %1478 = vmatprep.subr.bf16.mxu0 0
        %1479 = vmatpush2.bf16.msra.mxu0 0
        %1480 = vmatprep.subr.bf16.mxu0 0
        %1481 = vmatpush2.bf16.msra.mxu0 0
        %1482 = vmatprep.subr.bf16.mxu0 0
        %1483 = vmatpush2.bf16.msra.mxu0 0
        %1484 = vmatprep.subr.bf16.mxu0 0
        %1485 = vmatpush2.bf16.msra.mxu0 0
        %1486 = vmatprep.mubr.bf16.mxu0 0
        %1487 = vmatmul.mubr.bf16.gmra.mxu0 %v1452
        %v1488 = vpop.f32.mrf.mxu0
        %v1489 = vadd.f32 0.0, %v1488
        %v1490 = vpop.f32.mrf.mxu0
        %v1491 = vpop.f32.mrf.mxu0
        %v1492 = vpop.f32.mrf.mxu0
        %1493 = vdwg.mxu0
        %v1494 = vadd.f32 %v1264, %v1489
        %1495 = vrot.lane.b32.xlu0 %v690, 32
        %v1496 = vpop.permute.xlu0 %1495
        %1497 = vrot.lane.b32.xlu0 %v753, 32
        %v1498 = vpop.permute.xlu0 %1497
        %v1499 = vsel %vm592, %v1496, 0
        %v1501 = vsel %vm592, %v1498, 0
        %1503 = vmatprep.subr.mxu0 0.0
        %1504 = vmatpush1.xpose.msra.mxu0 0.0
        %1505 = vmatprep.subr.mxu0 0.0
        %1506 = vmatpush1.xpose.msra.mxu0 0.0
        %1507 = vmatprep.subr.mxu0 0.0
        %1508 = vmatpush1.xpose.msra.mxu0 0.0
        %1509 = vmatprep.subr.mxu0 0.0
        %1510 = vmatpush1.xpose.msra.mxu0 0.0
        %1511 = vmatprep.subr.mxu0 0.0
        %1512 = vmatpush1.xpose.msra.mxu0 0.0
        %1513 = vmatprep.subr.mxu0 0.0
        %1514 = vmatpush1.xpose.msra.mxu0 0.0
        %1515 = vmatprep.subr.mxu0 0.0
        %1516 = vmatpush1.xpose.msra.mxu0 0.0
        %1517 = vmatprep.subr.mxu0 0.0
        %1518 = vmatpush1.xpose.msra.mxu0 0.0
        %1519 = vmatprep.subr.mxu0 0.0
        %1520 = vmatpush1.xpose.msra.mxu0 0.0
        %1521 = vmatprep.subr.mxu0 0.0
        %1522 = vmatpush1.xpose.msra.mxu0 0.0
        %1523 = vmatprep.subr.mxu0 0.0
        %1524 = vmatpush1.xpose.msra.mxu0 0.0
        %1525 = vmatprep.subr.mxu0 0.0
        %1526 = vmatpush1.xpose.msra.mxu0 0.0
        %1527 = vmatprep.subr.mxu0 0.0
        %1528 = vmatpush1.xpose.msra.mxu0 0.0
        %1529 = vmatprep.subr.mxu0 0.0
        %1530 = vmatpush1.xpose.msra.mxu0 0.0
        %1531 = vmatprep.subr.mxu0 0.0
        %1532 = vmatpush1.xpose.msra.mxu0 0.0
        %1533 = vmatprep.subr.mxu0 0.0
        %1534 = vmatpush1.xpose.msra.mxu0 %v1501
        %1535 = vmatprep.subr.mxu0 0.0
        %1536 = vmatpush2.xpose.msra.mxu0 0.0
        %1537 = vmatprep.subr.mxu0 0.0
        %1538 = vmatpush2.xpose.msra.mxu0 0.0
        %1539 = vmatprep.subr.mxu0 0.0
        %1540 = vmatpush2.xpose.msra.mxu0 0.0
        %1541 = vmatprep.subr.mxu0 0.0
        %1542 = vmatpush2.xpose.msra.mxu0 0.0
        %1543 = vmatprep.subr.mxu0 0.0
        %1544 = vmatpush2.xpose.msra.mxu0 0.0
        %1545 = vmatprep.subr.mxu0 0.0
        %1546 = vmatpush2.xpose.msra.mxu0 0.0
        %1547 = vmatprep.subr.mxu0 0.0
        %1548 = vmatpush2.xpose.msra.mxu0 0.0
        %1549 = vmatprep.subr.mxu0 0.0
        %1550 = vmatpush2.xpose.msra.mxu0 0.0
        %1551 = vmatprep.subr.mxu0 0.0
        %1552 = vmatpush2.xpose.msra.mxu0 0.0
        %1553 = vmatprep.subr.mxu0 0.0
        %1554 = vmatpush2.xpose.msra.mxu0 0.0
        %1555 = vmatprep.subr.mxu0 0.0
        %1556 = vmatpush2.xpose.msra.mxu0 0.0
        %1557 = vmatprep.subr.mxu0 0.0
        %1558 = vmatpush2.xpose.msra.mxu0 0.0
        %1559 = vmatprep.subr.mxu0 0.0
        %1560 = vmatpush2.xpose.msra.mxu0 0.0
        %1561 = vmatprep.subr.mxu0 0.0
        %1562 = vmatpush2.xpose.msra.mxu0 0.0
        %1563 = vmatprep.subr.mxu0 0.0
        %1564 = vmatpush2.xpose.msra.mxu0 0.0
        %1565 = vmatprep.subr.mxu0 0.0
        %1566 = vmatpush2.xpose.msra.mxu0 0.0
        %1567 = vmatprep.mubr.f32.mxu0 0.0
        %1568 = vmatmul.mubr.f32.gmra.mxu0 %v1499
        %v1569 = vpop.f32.mrf.mxu0
        %v1570 = vadd.f32 %v821, %v1569
        %v1571 = vpop.f32.mrf.mxu0
        %1572 = vdwg.mxu0
        %v1573 = vsel %vm898, %v1570, -inf
        %1574 = vmax.xlane.f32.xlu0 %v1573
        %v1575 = vpop.xlane.xlu0 %1574
        %v1576 = vsub.f32 %v1570, %v1575
        %v1577 = vmul.f32 %v1576, 1.442695
        %v1578 = vpow.pop %v1577
        %v1579 = vsel %vm898, %v1578, 0.0
        %1580 = vadd.xlane.f32.xlu0 %v1579
        %v1581 = vpop.xlane.xlu0 %1580
        %v1582 = vrcp.pop %v1581
        %v1583 = vmul.f32 %v1578, %v1582
        %1584 = vrot.lane.b32.xlu0 %v816, 32
        %v1585 = vpop.permute.xlu0 %1584
        %v1588 = vsel %vm898, %v1583, 0
        %1590 = vmatprep.subr.mxu0 0.0
        %1591 = vmatpush1.msra.mxu0 0.0
        %1592 = vmatprep.subr.mxu0 0.0
        %1593 = vmatpush1.msra.mxu0 0.0
        %1594 = vmatprep.subr.mxu0 0.0
        %1595 = vmatpush1.msra.mxu0 0.0
        %1596 = vmatprep.subr.mxu0 0.0
        %1597 = vmatpush1.msra.mxu0 0.0
        %1598 = vmatprep.subr.mxu0 0.0
        %1599 = vmatpush1.msra.mxu0 0.0
        %1600 = vmatprep.subr.mxu0 0.0
        %1601 = vmatpush1.msra.mxu0 0.0
        %1602 = vmatprep.subr.mxu0 0.0
        %1603 = vmatpush1.msra.mxu0 0.0
        %1604 = vmatprep.subr.mxu0 0.0
        %1605 = vmatpush1.msra.mxu0 0.0
        %1606 = vmatprep.subr.mxu0 0.0
        %1607 = vmatpush1.msra.mxu0 0.0
        %1608 = vmatprep.subr.mxu0 0.0
        %1609 = vmatpush1.msra.mxu0 0.0
        %1610 = vmatprep.subr.mxu0 0.0
        %1611 = vmatpush1.msra.mxu0 0.0
        %1612 = vmatprep.subr.mxu0 0.0
        %1613 = vmatpush1.msra.mxu0 0.0
        %1614 = vmatprep.subr.mxu0 0.0
        %1615 = vmatpush1.msra.mxu0 0.0
        %1616 = vmatprep.subr.mxu0 0.0
        %1617 = vmatpush1.msra.mxu0 0.0
        %1618 = vmatprep.subr.mxu0 0.0
        %1619 = vmatpush1.msra.mxu0 0.0
        %1620 = vmatprep.subr.mxu0 0.0
        %1621 = vmatpush1.msra.mxu0 %v1585
        %1622 = vmatprep.subr.mxu0 0.0
        %1623 = vmatpush2.msra.mxu0 0.0
        %1624 = vmatprep.subr.mxu0 0.0
        %1625 = vmatpush2.msra.mxu0 0.0
        %1626 = vmatprep.subr.mxu0 0.0
        %1627 = vmatpush2.msra.mxu0 0.0
        %1628 = vmatprep.subr.mxu0 0.0
        %1629 = vmatpush2.msra.mxu0 0.0
        %1630 = vmatprep.subr.mxu0 0.0
        %1631 = vmatpush2.msra.mxu0 0.0
        %1632 = vmatprep.subr.mxu0 0.0
        %1633 = vmatpush2.msra.mxu0 0.0
        %1634 = vmatprep.subr.mxu0 0.0
        %1635 = vmatpush2.msra.mxu0 0.0
        %1636 = vmatprep.subr.mxu0 0.0
        %1637 = vmatpush2.msra.mxu0 0.0
        %1638 = vmatprep.subr.mxu0 0.0
        %1639 = vmatpush2.msra.mxu0 0.0
        %1640 = vmatprep.subr.mxu0 0.0
        %1641 = vmatpush2.msra.mxu0 0.0
        %1642 = vmatprep.subr.mxu0 0.0
        %1643 = vmatpush2.msra.mxu0 0.0
        %1644 = vmatprep.subr.mxu0 0.0
        %1645 = vmatpush2.msra.mxu0 0.0
        %1646 = vmatprep.subr.mxu0 0.0
        %1647 = vmatpush2.msra.mxu0 0.0
        %1648 = vmatprep.subr.mxu0 0.0
        %1649 = vmatpush2.msra.mxu0 0.0
        %1650 = vmatprep.subr.mxu0 0.0
        %1651 = vmatpush2.msra.mxu0 0.0
        %1652 = vmatprep.subr.mxu0 0.0
        %1653 = vmatpush2.msra.mxu0 0.0
        %1654 = vmatprep.mubr.f32.mxu0 0.0
        %1655 = vmatmul.mubr.f32.gmra.mxu0 %v1588
        %v1656 = vpop.f32.mrf.mxu0
        %v1657 = vadd.f32 0.0, %v1656
        %v1658 = vpop.f32.mrf.mxu0
        %1659 = vdwg.mxu0
        %v1660 = vpack.c.bf16 %v1657, %v1657
        %v1661 = vld [vmem:[%s10 + $0x30] sm:$0xf]
        %v1662 = vld [vmem:[%s10 + $0x34] sm:$0xf]
        %v1663 = vld [vmem:[%s10 + $0x38] sm:$0xf]
        %v1664 = vld [vmem:[%s10 + $0x3c] sm:$0xf]
        %v1669 = vunpack.c.l.b16 %v1661
        %v1670 = vunpack.c.l.b16 %v1662
        %v1671 = vunpack.c.l.b16 %v1663
        %v1672 = vunpack.c.l.b16 %v1664
        %v1673 = vpack.c.b16 %v1670, %v1669
        %v1674 = vpack.c.b16 %v1672, %v1671
        %v1678 = vsel %vm592, %v1660, 0
        %1680 = vmatprep.subr.bf16.mxu0 0
        %1681 = vmatpush1.bf16.msra.mxu0 0
        %1682 = vmatprep.subr.bf16.mxu0 0
        %1683 = vmatpush1.bf16.msra.mxu0 0
        %1684 = vmatprep.subr.bf16.mxu0 0
        %1685 = vmatpush1.bf16.msra.mxu0 0
        %1686 = vmatprep.subr.bf16.mxu0 0
        %1687 = vmatpush1.bf16.msra.mxu0 0
        %1688 = vmatprep.subr.bf16.mxu0 0
        %1689 = vmatpush1.bf16.msra.mxu0 0
        %1690 = vmatprep.subr.bf16.mxu0 0
        %1691 = vmatpush1.bf16.msra.mxu0 0
        %1692 = vmatprep.subr.bf16.mxu0 0
        %1693 = vmatpush1.bf16.msra.mxu0 %v1674
        %1694 = vmatprep.subr.bf16.mxu0 0
        %1695 = vmatpush1.bf16.msra.mxu0 %v1673
        %1696 = vmatprep.subr.bf16.mxu0 0
        %1697 = vmatpush2.bf16.msra.mxu0 0
        %1698 = vmatprep.subr.bf16.mxu0 0
        %1699 = vmatpush2.bf16.msra.mxu0 0
        %1700 = vmatprep.subr.bf16.mxu0 0
        %1701 = vmatpush2.bf16.msra.mxu0 0
        %1702 = vmatprep.subr.bf16.mxu0 0
        %1703 = vmatpush2.bf16.msra.mxu0 0
        %1704 = vmatprep.subr.bf16.mxu0 0
        %1705 = vmatpush2.bf16.msra.mxu0 0
        %1706 = vmatprep.subr.bf16.mxu0 0
        %1707 = vmatpush2.bf16.msra.mxu0 0
        %1708 = vmatprep.subr.bf16.mxu0 0
        %1709 = vmatpush2.bf16.msra.mxu0 0
        %1710 = vmatprep.subr.bf16.mxu0 0
        %1711 = vmatpush2.bf16.msra.mxu0 0
        %1712 = vmatprep.mubr.bf16.mxu0 0
        %1713 = vmatmul.mubr.bf16.gmra.mxu0 %v1678
        %v1714 = vpop.f32.mrf.mxu0
        %v1715 = vadd.f32 0.0, %v1714
        %v1716 = vpop.f32.mrf.mxu0
        %v1717 = vpop.f32.mrf.mxu0
        %v1718 = vpop.f32.mrf.mxu0
        %1719 = vdwg.mxu0
        %v1720 = vadd.f32 %v1494, %v1715
        %v1721 = vadd.f32 %v589, %v1720
        %v1722 = vld [vmem:[%s11] sm:$0x1]
        %v1724 = vlaneseq
        %v1725 = vshrl.u32 %v1724, 7
        %v1726 = vsub.s32 0, %v1725
        %v1727 = vrot.slane %v1722, %v1726
        %v1729 = vadd.f32 %v1721, %v1727
        %v1730 = vld [vmem:[%s12] sm:$0x1]
        %v1731 = vld [vmem:[%s13] sm:$0x1]
        %v1732 = vsel %vm592, %v1729, 0.0
        %1733 = vadd.xlane.f32.xlu0 %v1732
        %v1734 = vpop.xlane.xlu0 %1733
        %v1735 = vmul.f32 %v1734, %v596
        %v1736 = vsub.f32 %v1729, %v1735
        %v1737 = vmul.f32 %v1736, %v1736
        %v1738 = vsel %vm592, %v1737, 0.0
        %1739 = vadd.xlane.f32.xlu0 %v1738
        %v1740 = vpop.xlane.xlu0 %1739
        %v1741 = vmul.f32 %v1740, 0.032258064
        %v1742 = vrsqrt.pop %v1741
        %v1743 = vmul.f32 %v1741, %v1742
        %vm1744 = vcmp.eq.f32.partialorder %v1741, inf
        %v1745 = vsel %vm1744, %v1741, %v1743
        %vm1746 = vcmp.eq.f32.partialorder %v1741, 0.0
        %v1747 = vand.u32 %v1741, 2147483648
        %v1748 = vsel %vm1746, %v1747, %v1745
        %v1750 = vlaneseq
        %v1751 = vshrl.u32 %v1750, 7
        %v1752 = vsub.s32 0, %v1751
        %v1753 = vrot.slane %v1730, %v1752
        %v1755 = vmul.f32 %v1753, %v1736
        %v1756 = vadd.f32 %v1748, 1e-06
        %v1757 = vrcp.pop %v1756
        %v1758 = vmul.f32 %v1755, %v1757
        %v1760 = vlaneseq
        %v1761 = vshrl.u32 %v1760, 7
        %v1762 = vsub.s32 0, %v1761
        %v1763 = vrot.slane %v1731, %v1762
        %v1765 = vadd.f32 %v1758, %v1763
        %v1766 = vpack.c.bf16 %v1765, %v1765
        %v1767 = vld [vmem:[%s14] sm:$0xf]
        %v1768 = vld [vmem:[%s14 + $0x4] sm:$0xf]
        %v1769 = vld [vmem:[%s14 + $0x8] sm:$0xf]
        %v1770 = vld [vmem:[%s14 + $0xc] sm:$0xf]
        %v1771 = vld [vmem:[%s15] sm:$0x1]
        %v1773 = vlaneseq
        %v1774 = vshrl.u32 %v1773, 7
        %v1775 = vsub.s32 0, %v1774
        %v1776 = vrot.slane %v1771, %v1775
        %v1782 = vunpack.c.l.b16 %v1767
        %v1783 = vunpack.c.l.b16 %v1768
        %v1784 = vunpack.c.l.b16 %v1769
        %v1785 = vunpack.c.l.b16 %v1770
        %v1786 = vpack.c.b16 %v1783, %v1782
        %v1787 = vpack.c.b16 %v1785, %v1784
        %v1791 = vsel %vm592, %v1766, 0
        %1793 = vmatprep.subr.bf16.mxu0 0
        %1794 = vmatpush1.bf16.msra.mxu0 0
        %1795 = vmatprep.subr.bf16.mxu0 0
        %1796 = vmatpush1.bf16.msra.mxu0 0
        %1797 = vmatprep.subr.bf16.mxu0 0
        %1798 = vmatpush1.bf16.msra.mxu0 0
        %1799 = vmatprep.subr.bf16.mxu0 0
        %1800 = vmatpush1.bf16.msra.mxu0 0
        %1801 = vmatprep.subr.bf16.mxu0 0
        %1802 = vmatpush1.bf16.msra.mxu0 0
        %1803 = vmatprep.subr.bf16.mxu0 0
        %1804 = vmatpush1.bf16.msra.mxu0 0
        %1805 = vmatprep.subr.bf16.mxu0 0
        %1806 = vmatpush1.bf16.msra.mxu0 %v1787
        %1807 = vmatprep.subr.bf16.mxu0 0
        %1808 = vmatpush1.bf16.msra.mxu0 %v1786
        %1809 = vmatprep.subr.bf16.mxu0 0
        %1810 = vmatpush2.bf16.msra.mxu0 0
        %1811 = vmatprep.subr.bf16.mxu0 0
        %1812 = vmatpush2.bf16.msra.mxu0 0
        %1813 = vmatprep.subr.bf16.mxu0 0
        %1814 = vmatpush2.bf16.msra.mxu0 0
        %1815 = vmatprep.subr.bf16.mxu0 0
        %1816 = vmatpush2.bf16.msra.mxu0 0
        %1817 = vmatprep.subr.bf16.mxu0 0
        %1818 = vmatpush2.bf16.msra.mxu0 0
        %1819 = vmatprep.subr.bf16.mxu0 0
        %1820 = vmatpush2.bf16.msra.mxu0 0
        %1821 = vmatprep.subr.bf16.mxu0 0
        %1822 = vmatpush2.bf16.msra.mxu0 0
        %1823 = vmatprep.subr.bf16.mxu0 0
        %1824 = vmatpush2.bf16.msra.mxu0 0
        %1825 = vmatprep.mubr.bf16.mxu0 0
        %1826 = vmatmul.mubr.bf16.gmra.mxu0 %v1791
        %v1827 = vpop.f32.mrf.mxu0
        %v1828 = vadd.f32 %v1776, %v1827
        %v1829 = vpop.f32.mrf.mxu0
        %v1830 = vpop.f32.mrf.mxu0
        %v1831 = vpop.f32.mrf.mxu0
        %1832 = vdwg.mxu0
        %v1833 = vmax.f32 %v1828, 0.0
        %v1834 = vpack.c.bf16 %v1833, %v1833
        %v1835 = vld [vmem:[%s16] sm:$0xf]
        %v1836 = vld [vmem:[%s16 + $0x4] sm:$0xf]
        %v1837 = vld [vmem:[%s16 + $0x8] sm:$0xf]
        %v1838 = vld [vmem:[%s16 + $0xc] sm:$0xf]
        %v1839 = vld [vmem:[%s16 + $0x10] sm:$0xf]
        %v1840 = vld [vmem:[%s16 + $0x14] sm:$0xf]
        %v1841 = vld [vmem:[%s16 + $0x18] sm:$0xf]
        %v1842 = vld [vmem:[%s16 + $0x1c] sm:$0xf]
        %v1843 = vld [vmem:[%s17] sm:$0x1]
        %v1845 = vlaneseq
        %v1846 = vshrl.u32 %v1845, 7
        %v1847 = vsub.s32 0, %v1846
        %v1848 = vrot.slane %v1843, %v1847
        %v1858 = vunpack.c.l.b16 %v1835
        %v1859 = vunpack.c.l.b16 %v1836
        %v1860 = vunpack.c.l.b16 %v1837
        %v1861 = vunpack.c.l.b16 %v1838
        %v1862 = vunpack.c.l.b16 %v1839
        %v1863 = vunpack.c.l.b16 %v1840
        %v1864 = vunpack.c.l.b16 %v1841
        %v1865 = vunpack.c.l.b16 %v1842
        %v1866 = vpack.c.b16 %v1859, %v1858
        %v1867 = vpack.c.b16 %v1861, %v1860
        %v1868 = vpack.c.b16 %v1863, %v1862
        %v1869 = vpack.c.b16 %v1865, %v1864
        %vm1874 = vcmask 523264
        %v1876 = vsel %vm1874, %v1834, 0
        %1878 = vmatprep.subr.bf16.mxu0 0
        %1879 = vmatpush1.bf16.msra.mxu0 0
        %1880 = vmatprep.subr.bf16.mxu0 0
        %1881 = vmatpush1.bf16.msra.mxu0 0
        %1882 = vmatprep.subr.bf16.mxu0 0
        %1883 = vmatpush1.bf16.msra.mxu0 0
        %1884 = vmatprep.subr.bf16.mxu0 0
        %1885 = vmatpush1.bf16.msra.mxu0 0
        %1886 = vmatprep.subr.bf16.mxu0 0
        %1887 = vmatpush1.bf16.msra.mxu0 %v1869
        %1888 = vmatprep.subr.bf16.mxu0 0
        %1889 = vmatpush1.bf16.msra.mxu0 %v1868
        %1890 = vmatprep.subr.bf16.mxu0 0
        %1891 = vmatpush1.bf16.msra.mxu0 %v1867
        %1892 = vmatprep.subr.bf16.mxu0 0
        %1893 = vmatpush1.bf16.msra.mxu0 %v1866
        %1894 = vmatprep.subr.bf16.mxu0 0
        %1895 = vmatpush2.bf16.msra.mxu0 0
        %1896 = vmatprep.subr.bf16.mxu0 0
        %1897 = vmatpush2.bf16.msra.mxu0 0
        %1898 = vmatprep.subr.bf16.mxu0 0
        %1899 = vmatpush2.bf16.msra.mxu0 0
        %1900 = vmatprep.subr.bf16.mxu0 0
        %1901 = vmatpush2.bf16.msra.mxu0 0
        %1902 = vmatprep.subr.bf16.mxu0 0
        %1903 = vmatpush2.bf16.msra.mxu0 0
        %1904 = vmatprep.subr.bf16.mxu0 0
        %1905 = vmatpush2.bf16.msra.mxu0 0
        %1906 = vmatprep.subr.bf16.mxu0 0
        %1907 = vmatpush2.bf16.msra.mxu0 0
        %1908 = vmatprep.subr.bf16.mxu0 0
        %1909 = vmatpush2.bf16.msra.mxu0 0
        %1910 = vmatprep.mubr.bf16.mxu0 0
        %1911 = vmatmul.mubr.bf16.gmra.mxu0 %v1876
        %v1912 = vpop.f32.mrf.mxu0
        %v1913 = vadd.f32 %v1848, %v1912
        %v1914 = vpop.f32.mrf.mxu0
        %v1915 = vpop.f32.mrf.mxu0
        %v1916 = vpop.f32.mrf.mxu0
        %1917 = vdwg.mxu0
        %v1918 = vadd.f32 %v1729, %v1913
        %1919 = vst.msk [vmem:[%s579] sm:$0xff] %vm592, %v1918
        %s1920 = sand.u32 %s428, 1
        %s1921 = scalar_lea.sflag [#allocation3], %s1920
        %s1922 = sand.u32 %s428, 1
        %s1923 = smul.addr %s1922, 8
        %s1924 = scalar_lea.vmem [#allocation2], %s1923
        // Predicated region
        $region93: #{encoder_layer_forward.1} parent=91 // pred_check
          %p1925 = pneg %p438
        $region94: #{encoder_layer_forward.1} parent=91 // pred_check_branch
          %1927 = sbr.rel (%p1925) target = $region96
        $region95: #{encoder_layer_forward.1} parent=91 // pred_region
          %s1929 = ssub.s32 128, 128
          %1930 = vsyncadd %s1921, %s1929
          %s1931 = smul.addr %s32, 128
          %s1932 = scalar_lea.hbm %s18, %s1931
          %s1934 = sshll.u32 %s1924, 4
          %s1935 = int_to_ptr.vmem [resolvable:$true] %s1934
          %1937 = dma.vmem_to_hbm [thread:$0]  %s1935, 128, %s1932, %s1921
        $region96: #{encoder_layer_forward.1} parent=91 // pred_fallthru
          _
      $region92: #{encoder_layer_forward.1} parent=5 // pred_fallthru
        _
      %p1938 = scmp.le.s32.totalorder 2, %s27
      // Predicated region
      $region97: #{encoder_layer_forward.1} parent=5 // pred_check
        %p1939 = pneg %p1938
      $region98: #{encoder_layer_forward.1} parent=5 // pred_check_branch
        %1941 = sbr.rel (%p1939) target = $region100
      $region99: #{encoder_layer_forward.1} parent=5 // pred_region
        %s1942 = ssub.s32 %s27, 2
        // Predicated region
        $region101: #{encoder_layer_forward.1} parent=99 // pred_check
          %p1943 = pneg %p444
        $region102: #{encoder_layer_forward.1} parent=99 // pred_check_branch
          %1945 = sbr.rel (%p1943) target = $region104
        $region103: #{encoder_layer_forward.1} parent=99 // pred_region
          %s1946 = sand.u32 %s429, 1
          %s1947 = scalar_lea.sflag [#allocation3], %s1946
          %s1948 = sand.u32 %s429, 1
          %s1949 = smul.addr %s1948, 8
          %s1950 = scalar_lea.vmem [#allocation2], %s1949
          %1951 = dma.done %s1947, 128
        $region104: #{encoder_layer_forward.1} parent=99 // pred_fallthru
          _
      $region100: #{encoder_layer_forward.1} parent=5 // pred_fallthru
        _
    $region6: #{encoder_layer_forward.1} parent=1 // loop_footer
      %s31 = sadd.s32 1, %s27
    $region7: #{encoder_layer_forward.1} parent=1 // loop_footer_branch
      %26 = sbr.rel target = $region3
    $region8: #{encoder_layer_forward.1} parent=1 // loop_exit
      _
    %1952 = vsyncpa [#allocation3], 1
    %s1953 = scalar_lea.sflag [#allocation3], 1
    %1954 = vsyncpa %s1953, 1

</llo_original>
